<compile_context>
chip_gen: v7x
topology: tpu7x:2x2x1
jax: 0.10.0
libtpu: 0.0.40
codegen_flags: <defaults>
</compile_context>

<pallas_src>
import functools

import jax
import jax.numpy as jnp
from jax import lax
from jax.experimental import pallas as pl
from jax.experimental.pallas import tpu as pltpu


def _round_up(x, m):
    return ((x + m - 1) // m) * m


def gru_encoder_kernel(xt_ref, w_ih_ref, w_hh_ref, b_gi_ref, b_hhn_ref,
                       w_lat_ref, b_lat_ref, out_ref, gi_ref, h_ref,
                       *, seq_len, chunk, unroll):
    """One (batch tile, time chunk) grid step of the GRU encoder.

    xt_ref   : (Tc*BT, Din)  bf16  time-major chunk of the (padded) inputs
    w_ih_ref : (Din, 3*Hp)   bf16  per-gate columns padded to 128 lanes (r,z,n)
    w_hh_ref : (Hp, 3*Hp)    bf16  rows >= H and padded gate columns are zero
    b_gi_ref : (1, 3*Hp)     f32   b_ih with b_hh_r / b_hh_z folded in
    b_hhn_ref: (1, Hp)       f32   b_hh_n (must stay inside r * (.))
    w_lat_ref: (Hp, Lp)      bf16  rows >= H / cols >= L are zero
    b_lat_ref: (1, Lp)       f32   cols >= L are zero
    out_ref  : (BT, Lp)      f32   written at the last time chunk only
    gi_ref   : (Tc*BT, 3*Hp) bf16  VMEM scratch: hoisted input projection
    h_ref    : (BT, Hp)      f32   VMEM scratch: hidden-state carry
    """
    tc = pl.program_id(1)
    n_tc = pl.num_programs(1)
    BT, Hp = h_ref.shape

    @pl.when(tc == 0)
    def _init():
        h_ref[...] = jnp.zeros_like(h_ref)

    # Hoisted input projection for this chunk: one well-shaped MXU pass that
    # does not depend on h, so it stays off the serial recurrence chain.
    # Staged in bf16 to halve the largest VMEM consumer.
    gi_ref[...] = (
        jnp.dot(xt_ref[...], w_ih_ref[...], preferred_element_type=jnp.float32)
        + b_gi_ref[...]).astype(jnp.bfloat16)

    w_hh = w_hh_ref[...]                                     # loop-invariant bf16
    b_hh_n = jnp.broadcast_to(b_hhn_ref[...], (BT, Hp))      # hoisted broadcast

    def step(ti, h):
        row0 = pl.multiple_of(ti * BT, 16)                   # bf16 sublane-tile aligned
        gi = gi_ref[pl.ds(row0, BT), :].astype(jnp.float32)  # (BT, 3Hp), off the h-chain
        gh = jnp.dot(h.astype(jnp.bfloat16), w_hh,
                     preferred_element_type=jnp.float32)     # (BT, 3Hp)
        # Gate slices land on 128-lane tile boundaries -> free views.
        r = jax.nn.sigmoid(gi[:, 0:Hp] + gh[:, 0:Hp])
        z = jax.nn.sigmoid(gi[:, Hp:2 * Hp] + gh[:, Hp:2 * Hp])
        n = jnp.tanh(gi[:, 2 * Hp:3 * Hp] + r * (gh[:, 2 * Hp:3 * Hp] + b_hh_n))
        h_new = (1.0 - z) * n + z * h                        # PyTorch GRU update
        if seq_len % chunk != 0:
            # Only the last chunk contains padded steps; mask them. This
            # branch is traced only when time padding actually exists.
            h_new = jnp.where(tc * chunk + ti < seq_len, h_new, h)
        return h_new

    h = lax.fori_loop(0, chunk, step, h_ref[...], unroll=unroll)
    h_ref[...] = h

    @pl.when(tc == n_tc - 1)
    def _finalize():
        out_ref[...] = (
            jnp.dot(h.astype(jnp.bfloat16), w_lat_ref[...],
                    preferred_element_type=jnp.float32) + b_lat_ref[...])


def _vmem_limit_bytes(Tc, BT, Din, Hp, Lp):
    """Rough VMEM budget (lane/sublane padded, double-buffering counted)."""
    def tile_bytes(rows, cols, itemsize):
        sub = 8 * (4 // itemsize)            # 8 rows for f32, 16 for bf16
        return _round_up(rows, sub) * _round_up(cols, 128) * itemsize

    need = 0
    # Weights / biases (constant index map; count double-buffered to be safe).
    need += 2 * tile_bytes(Din, 3 * Hp, 2)
    need += 2 * tile_bytes(Hp, 3 * Hp, 2)
    need += 2 * tile_bytes(1, 3 * Hp, 4)
    need += 2 * tile_bytes(1, Hp, 4)
    need += 2 * tile_bytes(Hp, Lp, 2)
    need += 2 * tile_bytes(1, Lp, 4)
    # Streamed input chunk + resident output tile (double-buffered).
    need += 2 * tile_bytes(Tc * BT, Din, 2)
    need += 2 * tile_bytes(BT, Lp, 4)
    # Scratch.
    need += tile_bytes(Tc * BT, 3 * Hp, 2)
    need += tile_bytes(BT, Hp, 4)
    # Headroom for compiler-internal scratch / pipelining bookkeeping.
    return int(min(max(2 * need + (2 << 20), 32 << 20), 100 << 20))


def init_params(key, input_dim, hidden_dim, latent_dim):
    """Deterministic synthetic parameters in PyTorch GRU/Linear layout."""
    k = jax.random.split(key, 6)
    s = 1.0 / jnp.sqrt(hidden_dim)
    din = input_dim + 1
    return {
        # PyTorch: weight_ih_l0 (3H, Din), weight_hh_l0 (3H, H), gate order r,z,n
        "w_ih": jax.random.uniform(k[0], (3 * hidden_dim, din), jnp.float32, -s, s),
        "w_hh": jax.random.uniform(k[1], (3 * hidden_dim, hidden_dim), jnp.float32, -s, s),
        "b_ih": jax.random.uniform(k[2], (3 * hidden_dim,), jnp.float32, -s, s),
        "b_hh": jax.random.uniform(k[3], (3 * hidden_dim,), jnp.float32, -s, s),
        # hid2lat: Linear(hidden_dim, latent_dim)
        "w_lat": jax.random.uniform(k[4], (latent_dim, hidden_dim), jnp.float32, -s, s),
        "b_lat": jax.random.uniform(k[5], (latent_dim,), jnp.float32, -s, s),
    }


def _pack_gates_T(w, H, Hp):
    """(3H, K) PyTorch gate-stacked weight -> (K, 3*Hp); gate g occupies
    columns [g*Hp, g*Hp + H); padded columns are exactly zero."""
    K = w.shape[1]
    out = jnp.zeros((K, 3 * Hp), jnp.float32)
    for g in range(3):
        out = out.at[:, g * Hp:g * Hp + H].set(w[g * H:(g + 1) * H, :].T)
    return out


def prepare_params(params):
    """One-time repack: transpose, per-gate 128-lane padding, bias folding,
    bf16 cast. No transposes / reshapes run per forward call."""
    w_ih, w_hh = params["w_ih"], params["w_hh"]
    b_ih, b_hh = params["b_ih"], params["b_hh"]
    w_lat, b_lat = params["w_lat"], params["b_lat"]
    H = w_hh.shape[1]
    Hp = _round_up(H, 128)
    L = w_lat.shape[0]
    Lp = _round_up(L, 128)

    def pack_bias(b, gates):
        out = jnp.zeros((1, 3 * Hp), jnp.float32)
        for g in gates:
            out = out.at[0, g * Hp:g * Hp + H].set(b[g * H:(g + 1) * H])
        return out

    # b_hh for the r and z gates folds into the hoisted input projection
    # (they sit outside the r-multiply); b_hh_n must stay per-step.
    b_gi = pack_bias(b_ih, (0, 1, 2)) + pack_bias(b_hh, (0, 1))
    b_hh_n = jnp.zeros((1, Hp), jnp.float32).at[0, :H].set(b_hh[2 * H:3 * H])

    w_ih_p = _pack_gates_T(w_ih, H, Hp).astype(jnp.bfloat16)            # (Din, 3Hp)
    w_hh_p = (jnp.zeros((Hp, 3 * Hp), jnp.float32)
              .at[:H, :].set(_pack_gates_T(w_hh, H, Hp))
              .astype(jnp.bfloat16))                                     # (Hp, 3Hp)
    w_lat_p = (jnp.zeros((Hp, Lp), jnp.float32)
               .at[:H, :L].set(w_lat.T).astype(jnp.bfloat16))            # (Hp, Lp)
    b_lat_p = jnp.zeros((1, Lp), jnp.float32).at[0, :L].set(b_lat)

    return {"w_ih": w_ih_p, "w_hh": w_hh_p, "b_gi": b_gi, "b_hh_n": b_hh_n,
            "w_lat": w_lat_p, "b_lat": b_lat_p}


@functools.partial(jax.jit,
                   static_argnames=("latent_dim", "time_chunk", "batch_tile"))
def rnn_encoder_forward(x, t, prepped, *, latent_dim, time_chunk=32,
                        batch_tile=None):
    """x: (B, T, input_dim) f32, t: (B, T) f32 -> (B, latent_dim) f32."""
    B, T, input_dim = x.shape
    Din = input_dim + 1
    Hp = prepped["w_hh"].shape[0]
    Lp = prepped["w_lat"].shape[1]

    # ---- batch / time tiling (all static) ----------------------------------
    Bp0 = _round_up(B, 16)            # 16: bf16 sublane tile of the gi scratch
    if batch_tile is None:
        # Fill MXU rows when the batch allows it; don't split tiny batches.
        BT = Bp0 if Bp0 <= 256 else 256
    else:
        BT = _round_up(batch_tile, 16)
    Bp = _round_up(Bp0, BT)
    nb = Bp // BT

    Tc = max(1, min(time_chunk, T))
    Tp = _round_up(T, Tc)
    nt = Tp // Tc
    unroll = next(u for u in (8, 4, 2, 1) if Tc % u == 0)

    # ---- t_diff / concat glue (plain JAX) ----------------------------------
    t_diff = jnp.concatenate(
        [jnp.zeros((B, 1), x.dtype), t[:, 1:] - t[:, :-1]], axis=1)
    xt = jnp.concatenate([x, t_diff[..., None]], axis=-1)        # (B, T, Din)

    # Pad batch/time (padded rows are independent & sliced off; padded time
    # steps are masked in the kernel when T % Tc != 0) and lay out as
    # (nb, Tp*BT, Din): time-major inside each batch tile so the kernel's
    # per-step row slice of the staged projection is a contiguous,
    # sublane-aligned window. Pure one-shot layout plumbing.
    xt = jnp.pad(xt, ((0, Bp - B), (0, Tp - T), (0, 0)))         # (Bp, Tp, Din)
    xt = xt.reshape(nb, BT, Tp, Din).transpose(0, 2, 1, 3)       # (nb, Tp, BT, Din)
    xt = xt.reshape(nb, Tp * BT, Din).astype(jnp.bfloat16)

    kernel = functools.partial(gru_encoder_kernel,
                               seq_len=T, chunk=Tc, unroll=unroll)

    out = pl.pallas_call(
        kernel,
        out_shape=jax.ShapeDtypeStruct((Bp, Lp), jnp.float32),
        grid=(nb, nt),
        in_specs=[
            pl.BlockSpec((None, Tc * BT, Din), lambda b, c: (b, c, 0)),  # xt chunk
            pl.BlockSpec((Din, 3 * Hp), lambda b, c: (0, 0)),            # w_ih
            pl.BlockSpec((Hp, 3 * Hp), lambda b, c: (0, 0)),             # w_hh
            pl.BlockSpec((1, 3 * Hp), lambda b, c: (0, 0)),              # b_gi
            pl.BlockSpec((1, Hp), lambda b, c: (0, 0)),                  # b_hh_n
            pl.BlockSpec((Hp, Lp), lambda b, c: (0, 0)),                 # w_lat
            pl.BlockSpec((1, Lp), lambda b, c: (0, 0)),                  # b_lat
        ],
        out_specs=pl.BlockSpec((BT, Lp), lambda b, c: (b, 0)),
        scratch_shapes=[
            pltpu.VMEM((Tc * BT, 3 * Hp), jnp.bfloat16),   # staged input projection
            pltpu.VMEM((BT, Hp), jnp.float32),             # hidden-state carry
        ],
        compiler_params=pltpu.CompilerParams(
            dimension_semantics=("parallel", "arbitrary"),
            vmem_limit_bytes=_vmem_limit_bytes(Tc, BT, Din, Hp, Lp)),
    )(xt, prepped["w_ih"], prepped["w_hh"], prepped["b_gi"],
      prepped["b_hh_n"], prepped["w_lat"], prepped["b_lat"])

    return out[:B, :latent_dim]


def rnn_encoder_reference(x, t, params, latent_dim):
    """Pure-JAX f32 reference of the PyTorch forward pass, for verification."""
    B, T, _ = x.shape
    H = params["w_hh"].shape[1]
    t_diff = jnp.concatenate(
        [jnp.zeros((B, 1), x.dtype), t[:, 1:] - t[:, :-1]], axis=1)
    xt = jnp.concatenate([x, t_diff[..., None]], axis=-1)

    w_ih, w_hh = params["w_ih"], params["w_hh"]
    b_ih, b_hh = params["b_ih"], params["b_hh"]

    def step(h, x_t):
        gi = x_t @ w_ih.T + b_ih
        gh = h @ w_hh.T + b_hh
        r = jax.nn.sigmoid(gi[:, :H] + gh[:, :H])
        z = jax.nn.sigmoid(gi[:, H:2 * H] + gh[:, H:2 * H])
        n = jnp.tanh(gi[:, 2 * H:] + r * gh[:, 2 * H:])
        return (1.0 - z) * n + z * h, None

    h0 = jnp.zeros((B, H), jnp.float32)
    hT, _ = lax.scan(step, h0, jnp.transpose(xt, (1, 0, 2)))
    z0 = hT @ params["w_lat"].T + params["b_lat"]
    return z0[:, :latent_dim]


if __name__ == "__main__":
    input_dim, hidden_dim, latent_dim = 4, 32, 16
    B, T = 2, 8

    key = jax.random.PRNGKey(0)
    kx, kt, kp = jax.random.split(key, 3)
    x = jax.random.normal(kx, (B, T, input_dim), jnp.float32)
    # monotonically increasing times
    t = jnp.cumsum(jax.random.uniform(kt, (B, T), jnp.float32, 0.1, 1.0), axis=1)
    params = init_params(kp, input_dim, hidden_dim, latent_dim)
    prepped = prepare_params(params)

    # time_chunk=4 -> two time chunks: exercises the pl.when hidden-state
    # carry / finalize path of the pipelined grid.
    z0 = rnn_encoder_forward(x, t, prepped, latent_dim=latent_dim, time_chunk=4)
    z0 = jax.block_until_ready(z0)

    z0_ref = rnn_encoder_reference(x, t, params, latent_dim)
    assert z0.shape == (B, latent_dim)
    # bf16 matmul operands / bf16 gi staging (f32 accumulation & gate math)
    # -> slightly looser tolerance.
    assert jnp.allclose(z0, z0_ref, atol=5e-2, rtol=5e-2), "mismatch vs reference"

    print("KERNEL_OK")
</pallas_src>

<mosaic_0001>
module attributes {stable_mosaic.version = 11 : i64} {
  func.func @gru_encoder_kernel(%arg0: i32, %arg1: i32, %arg2: memref<1x64x5xbf16, #tpu.memory_space<vmem>>, %arg3: memref<5x384xbf16, #tpu.memory_space<vmem>>, %arg4: memref<128x384xbf16, #tpu.memory_space<vmem>>, %arg5: memref<1x384xf32, #tpu.memory_space<vmem>>, %arg6: memref<1x128xf32, #tpu.memory_space<vmem>>, %arg7: memref<128x128xbf16, #tpu.memory_space<vmem>>, %arg8: memref<1x128xf32, #tpu.memory_space<vmem>>, %arg9: memref<16x128xf32, #tpu.memory_space<vmem>>, %arg10: memref<64x384xbf16, #tpu.memory_space<vmem>>, %arg11: memref<16x128xf32, #tpu.memory_space<vmem>>) attributes {dimension_semantics = [#tpu.dimension_semantics<parallel>, #tpu.dimension_semantics<arbitrary>], iteration_bounds = array<i64: 1, 2>, scalar_prefetch = 0 : i64, scratch_operands = 2 : i64, tpu.core_type = #tpu.core_type<tc>, window_params = [{transform_indices = @transform_0, window_bounds = array<i64: 1, 64, 5>}, {pipeline_mode = #tpu.pipeline_mode<synchronous>, transform_indices = @transform_1, window_bounds = array<i64: 5, 384>}, {pipeline_mode = #tpu.pipeline_mode<synchronous>, transform_indices = @transform_2, window_bounds = array<i64: 128, 384>}, {pipeline_mode = #tpu.pipeline_mode<synchronous>, transform_indices = @transform_3, window_bounds = array<i64: 1, 384>}, {pipeline_mode = #tpu.pipeline_mode<synchronous>, transform_indices = @transform_4, window_bounds = array<i64: 1, 128>}, {pipeline_mode = #tpu.pipeline_mode<synchronous>, transform_indices = @transform_5, window_bounds = array<i64: 128, 128>}, {pipeline_mode = #tpu.pipeline_mode<synchronous>, transform_indices = @transform_6, window_bounds = array<i64: 1, 128>}, {transform_indices = @transform_7, window_bounds = array<i64: 16, 128>}]} {
    %c0_i32 = arith.constant 0 : i32
    %0 = arith.cmpi eq, %arg1, %c0_i32 : i32
    %1 = arith.extui %0 : i1 to i32
    %c0_i32_0 = arith.constant 0 : i32
    %2 = arith.cmpi ne, %1, %c0_i32_0 : i32
    scf.if %2 {
      %cst_43 = arith.constant 0.000000e+00 : f32
      %157 = vector.broadcast %cst_43 : f32 to vector<16x128xf32>
      %c0_44 = arith.constant 0 : index
      %c0_45 = arith.constant 0 : index
      %158 = vector.load %arg11[%c0_44, %c0_45] : memref<16x128xf32, #tpu.memory_space<vmem>>, vector<16x128xf32>
      tpu.vector_store %arg11[%c0_44, %c0_45], %157 {strides = array<i32>} : memref<16x128xf32, #tpu.memory_space<vmem>>, vector<16x128xf32>,
    } else {
    }
    %c0 = arith.constant 0 : index
    %c0_1 = arith.constant 0 : index
    %c0_2 = arith.constant 0 : index
    %3 = vector.load %arg2[%c0, %c0_1, %c0_2] : memref<1x64x5xbf16, #tpu.memory_space<vmem>>, vector<1x64x5xbf16>
    %4 = vector.shape_cast %3 : vector<1x64x5xbf16> to vector<64x5xbf16>
    %c0_3 = arith.constant 0 : index
    %c0_4 = arith.constant 0 : index
    %5 = vector.load %arg3[%c0_3, %c0_4] : memref<5x384xbf16, #tpu.memory_space<vmem>>, vector<5x384xbf16>
    %cst = arith.constant dense<0.000000e+00> : vector<64x384xf32>
    %6 = tpu.matmul %4, %5, %cst {dimension_numbers = #tpu.dot_dimension_numbers<[1], [0], [0], [1], [0, 0, 1, 1], [], []>} : vector<64x5xbf16>, vector<5x384xbf16>, vector<64x384xf32> -> vector<64x384xf32>
    %c0_5 = arith.constant 0 : index
    %c0_6 = arith.constant 0 : index
    %7 = vector.load %arg5[%c0_5, %c0_6] : memref<1x384xf32, #tpu.memory_space<vmem>>, vector<1x384xf32>
    %8 = vector.broadcast %7 : vector<1x384xf32> to vector<64x384xf32>
    %9 = arith.addf %6, %8 : vector<64x384xf32>
    %10 = arith.truncf %9 : vector<64x384xf32> to vector<64x384xbf16>
    %c0_7 = arith.constant 0 : index
    %c0_8 = arith.constant 0 : index
    %11 = vector.load %arg10[%c0_7, %c0_8] : memref<64x384xbf16, #tpu.memory_space<vmem>>, vector<64x384xbf16>
    tpu.vector_store %arg10[%c0_7, %c0_8], %10 {strides = array<i32>} : memref<64x384xbf16, #tpu.memory_space<vmem>>, vector<64x384xbf16>,
    %c0_9 = arith.constant 0 : index
    %c0_10 = arith.constant 0 : index
    %12 = vector.load %arg4[%c0_9, %c0_10] : memref<128x384xbf16, #tpu.memory_space<vmem>>, vector<128x384xbf16>
    %c0_11 = arith.constant 0 : index
    %c0_12 = arith.constant 0 : index
    %13 = vector.load %arg6[%c0_11, %c0_12] : memref<1x128xf32, #tpu.memory_space<vmem>>, vector<1x128xf32>
    %14 = vector.shape_cast %13 : vector<1x128xf32> to vector<1x128xf32>
    %15 = vector.broadcast %14 : vector<1x128xf32> to vector<16x128xf32>
    %c0_13 = arith.constant 0 : index
    %c0_14 = arith.constant 0 : index
    %16 = vector.load %arg11[%c0_13, %c0_14] : memref<16x128xf32, #tpu.memory_space<vmem>>, vector<16x128xf32>
    %c0_i32_15 = arith.constant 0 : i32
    %c16_i32 = arith.constant 16 : i32
    %17 = arith.muli %c0_i32_15, %c16_i32 : i32
    %18 = tpu.assume_multiple %17, 16 : i32
    %19 = arith.index_cast %18 : i32 to index
    %c0_16 = arith.constant 0 : index
    %20 = vector.load %arg10[%19, %c0_16] : memref<64x384xbf16, #tpu.memory_space<vmem>>, vector<16x384xbf16>
    %21 = arith.extf %20 : vector<16x384xbf16> to vector<16x384xf32>
    %22 = arith.truncf %16 : vector<16x128xf32> to vector<16x128xbf16>
    %cst_17 = arith.constant dense<0.000000e+00> : vector<16x384xf32>
    %23 = tpu.matmul %22, %12, %cst_17 {dimension_numbers = #tpu.dot_dimension_numbers<[1], [0], [0], [1], [0, 0, 1, 1], [], []>} : vector<16x128xbf16>, vector<128x384xbf16>, vector<16x384xf32> -> vector<16x384xf32>
    %24 = vector.extract_strided_slice %21 {offsets = [0, 0], sizes = [16, 128], strides = [1, 1]} : vector<16x384xf32> to vector<16x128xf32>
    %25 = vector.extract_strided_slice %23 {offsets = [0, 0], sizes = [16, 128], strides = [1, 1]} : vector<16x384xf32> to vector<16x128xf32>
    %26 = arith.addf %24, %25 : vector<16x128xf32>
    %27 = arith.negf %26 : vector<16x128xf32>
    %28 = math.exp %27 : vector<16x128xf32>
    %cst_18 = arith.constant 1.000000e+00 : f32
    %29 = vector.broadcast %cst_18 : f32 to vector<16x128xf32>
    %30 = arith.addf %29, %28 : vector<16x128xf32>
    %31 = arith.divf %29, %30 : vector<16x128xf32>
    %32 = vector.extract_strided_slice %21 {offsets = [0, 128], sizes = [16, 128], strides = [1, 1]} : vector<16x384xf32> to vector<16x128xf32>
    %33 = vector.extract_strided_slice %23 {offsets = [0, 128], sizes = [16, 128], strides = [1, 1]} : vector<16x384xf32> to vector<16x128xf32>
    %34 = arith.addf %32, %33 : vector<16x128xf32>
    %35 = arith.negf %34 : vector<16x128xf32>
    %36 = math.exp %35 : vector<16x128xf32>
    %cst_19 = arith.constant 1.000000e+00 : f32
    %37 = vector.broadcast %cst_19 : f32 to vector<16x128xf32>
    %38 = arith.addf %37, %36 : vector<16x128xf32>
    %39 = arith.divf %37, %38 : vector<16x128xf32>
    %40 = vector.extract_strided_slice %21 {offsets = [0, 256], sizes = [16, 128], strides = [1, 1]} : vector<16x384xf32> to vector<16x128xf32>
    %41 = vector.extract_strided_slice %23 {offsets = [0, 256], sizes = [16, 128], strides = [1, 1]} : vector<16x384xf32> to vector<16x128xf32>
    %42 = arith.addf %41, %15 : vector<16x128xf32>
    %43 = arith.mulf %31, %42 : vector<16x128xf32>
    %44 = arith.addf %40, %43 : vector<16x128xf32>
    %45 = math.tanh %44 : vector<16x128xf32>
    %cst_20 = arith.constant 1.000000e+00 : f32
    %46 = vector.broadcast %cst_20 : f32 to vector<16x128xf32>
    %47 = arith.subf %46, %39 : vector<16x128xf32>
    %48 = arith.mulf %47, %45 : vector<16x128xf32>
    %49 = arith.mulf %39, %16 : vector<16x128xf32>
    %50 = arith.addf %48, %49 : vector<16x128xf32>
    %c1_i32 = arith.constant 1 : i32
    %c16_i32_21 = arith.constant 16 : i32
    %51 = arith.muli %c1_i32, %c16_i32_21 : i32
    %52 = tpu.assume_multiple %51, 16 : i32
    %53 = arith.index_cast %52 : i32 to index
    %c0_22 = arith.constant 0 : index
    %54 = vector.load %arg10[%53, %c0_22] : memref<64x384xbf16, #tpu.memory_space<vmem>>, vector<16x384xbf16>
    %55 = arith.extf %54 : vector<16x384xbf16> to vector<16x384xf32>
    %56 = arith.truncf %50 : vector<16x128xf32> to vector<16x128xbf16>
    %cst_23 = arith.constant dense<0.000000e+00> : vector<16x384xf32>
    %57 = tpu.matmul %56, %12, %cst_23 {dimension_numbers = #tpu.dot_dimension_numbers<[1], [0], [0], [1], [0, 0, 1, 1], [], []>} : vector<16x128xbf16>, vector<128x384xbf16>, vector<16x384xf32> -> vector<16x384xf32>
    %58 = vector.extract_strided_slice %55 {offsets = [0, 0], sizes = [16, 128], strides = [1, 1]} : vector<16x384xf32> to vector<16x128xf32>
    %59 = vector.extract_strided_slice %57 {offsets = [0, 0], sizes = [16, 128], strides = [1, 1]} : vector<16x384xf32> to vector<16x128xf32>
    %60 = arith.addf %58, %59 : vector<16x128xf32>
    %61 = arith.negf %60 : vector<16x128xf32>
    %62 = math.exp %61 : vector<16x128xf32>
    %cst_24 = arith.constant 1.000000e+00 : f32
    %63 = vector.broadcast %cst_24 : f32 to vector<16x128xf32>
    %64 = arith.addf %63, %62 : vector<16x128xf32>
    %65 = arith.divf %63, %64 : vector<16x128xf32>
    %66 = vector.extract_strided_slice %55 {offsets = [0, 128], sizes = [16, 128], strides = [1, 1]} : vector<16x384xf32> to vector<16x128xf32>
    %67 = vector.extract_strided_slice %57 {offsets = [0, 128], sizes = [16, 128], strides = [1, 1]} : vector<16x384xf32> to vector<16x128xf32>
    %68 = arith.addf %66, %67 : vector<16x128xf32>
    %69 = arith.negf %68 : vector<16x128xf32>
    %70 = math.exp %69 : vector<16x128xf32>
    %cst_25 = arith.constant 1.000000e+00 : f32
    %71 = vector.broadcast %cst_25 : f32 to vector<16x128xf32>
    %72 = arith.addf %71, %70 : vector<16x128xf32>
    %73 = arith.divf %71, %72 : vector<16x128xf32>
    %74 = vector.extract_strided_slice %55 {offsets = [0, 256], sizes = [16, 128], strides = [1, 1]} : vector<16x384xf32> to vector<16x128xf32>
    %75 = vector.extract_strided_slice %57 {offsets = [0, 256], sizes = [16, 128], strides = [1, 1]} : vector<16x384xf32> to vector<16x128xf32>
    %76 = arith.addf %75, %15 : vector<16x128xf32>
    %77 = arith.mulf %65, %76 : vector<16x128xf32>
    %78 = arith.addf %74, %77 : vector<16x128xf32>
    %79 = math.tanh %78 : vector<16x128xf32>
    %cst_26 = arith.constant 1.000000e+00 : f32
    %80 = vector.broadcast %cst_26 : f32 to vector<16x128xf32>
    %81 = arith.subf %80, %73 : vector<16x128xf32>
    %82 = arith.mulf %81, %79 : vector<16x128xf32>
    %83 = arith.mulf %73, %50 : vector<16x128xf32>
    %84 = arith.addf %82, %83 : vector<16x128xf32>
    %c2_i32 = arith.constant 2 : i32
    %c16_i32_27 = arith.constant 16 : i32
    %85 = arith.muli %c2_i32, %c16_i32_27 : i32
    %86 = tpu.assume_multiple %85, 16 : i32
    %87 = arith.index_cast %86 : i32 to index
    %c0_28 = arith.constant 0 : index
    %88 = vector.load %arg10[%87, %c0_28] : memref<64x384xbf16, #tpu.memory_space<vmem>>, vector<16x384xbf16>
    %89 = arith.extf %88 : vector<16x384xbf16> to vector<16x384xf32>
    %90 = arith.truncf %84 : vector<16x128xf32> to vector<16x128xbf16>
    %cst_29 = arith.constant dense<0.000000e+00> : vector<16x384xf32>
    %91 = tpu.matmul %90, %12, %cst_29 {dimension_numbers = #tpu.dot_dimension_numbers<[1], [0], [0], [1], [0, 0, 1, 1], [], []>} : vector<16x128xbf16>, vector<128x384xbf16>, vector<16x384xf32> -> vector<16x384xf32>
    %92 = vector.extract_strided_slice %89 {offsets = [0, 0], sizes = [16, 128], strides = [1, 1]} : vector<16x384xf32> to vector<16x128xf32>
    %93 = vector.extract_strided_slice %91 {offsets = [0, 0], sizes = [16, 128], strides = [1, 1]} : vector<16x384xf32> to vector<16x128xf32>
    %94 = arith.addf %92, %93 : vector<16x128xf32>
    %95 = arith.negf %94 : vector<16x128xf32>
    %96 = math.exp %95 : vector<16x128xf32>
    %cst_30 = arith.constant 1.000000e+00 : f32
    %97 = vector.broadcast %cst_30 : f32 to vector<16x128xf32>
    %98 = arith.addf %97, %96 : vector<16x128xf32>
    %99 = arith.divf %97, %98 : vector<16x128xf32>
    %100 = vector.extract_strided_slice %89 {offsets = [0, 128], sizes = [16, 128], strides = [1, 1]} : vector<16x384xf32> to vector<16x128xf32>
    %101 = vector.extract_strided_slice %91 {offsets = [0, 128], sizes = [16, 128], strides = [1, 1]} : vector<16x384xf32> to vector<16x128xf32>
    %102 = arith.addf %100, %101 : vector<16x128xf32>
    %103 = arith.negf %102 : vector<16x128xf32>
    %104 = math.exp %103 : vector<16x128xf32>
    %cst_31 = arith.constant 1.000000e+00 : f32
    %105 = vector.broadcast %cst_31 : f32 to vector<16x128xf32>
    %106 = arith.addf %105, %104 : vector<16x128xf32>
    %107 = arith.divf %105, %106 : vector<16x128xf32>
    %108 = vector.extract_strided_slice %89 {offsets = [0, 256], sizes = [16, 128], strides = [1, 1]} : vector<16x384xf32> to vector<16x128xf32>
    %109 = vector.extract_strided_slice %91 {offsets = [0, 256], sizes = [16, 128], strides = [1, 1]} : vector<16x384xf32> to vector<16x128xf32>
    %110 = arith.addf %109, %15 : vector<16x128xf32>
    %111 = arith.mulf %99, %110 : vector<16x128xf32>
    %112 = arith.addf %108, %111 : vector<16x128xf32>
    %113 = math.tanh %112 : vector<16x128xf32>
    %cst_32 = arith.constant 1.000000e+00 : f32
    %114 = vector.broadcast %cst_32 : f32 to vector<16x128xf32>
    %115 = arith.subf %114, %107 : vector<16x128xf32>
    %116 = arith.mulf %115, %113 : vector<16x128xf32>
    %117 = arith.mulf %107, %84 : vector<16x128xf32>
    %118 = arith.addf %116, %117 : vector<16x128xf32>
    %c3_i32 = arith.constant 3 : i32
    %c16_i32_33 = arith.constant 16 : i32
    %119 = arith.muli %c3_i32, %c16_i32_33 : i32
    %120 = tpu.assume_multiple %119, 16 : i32
    %121 = arith.index_cast %120 : i32 to index
    %c0_34 = arith.constant 0 : index
    %122 = vector.load %arg10[%121, %c0_34] : memref<64x384xbf16, #tpu.memory_space<vmem>>, vector<16x384xbf16>
    %123 = arith.extf %122 : vector<16x384xbf16> to vector<16x384xf32>
    %124 = arith.truncf %118 : vector<16x128xf32> to vector<16x128xbf16>
    %cst_35 = arith.constant dense<0.000000e+00> : vector<16x384xf32>
    %125 = tpu.matmul %124, %12, %cst_35 {dimension_numbers = #tpu.dot_dimension_numbers<[1], [0], [0], [1], [0, 0, 1, 1], [], []>} : vector<16x128xbf16>, vector<128x384xbf16>, vector<16x384xf32> -> vector<16x384xf32>
    %126 = vector.extract_strided_slice %123 {offsets = [0, 0], sizes = [16, 128], strides = [1, 1]} : vector<16x384xf32> to vector<16x128xf32>
    %127 = vector.extract_strided_slice %125 {offsets = [0, 0], sizes = [16, 128], strides = [1, 1]} : vector<16x384xf32> to vector<16x128xf32>
    %128 = arith.addf %126, %127 : vector<16x128xf32>
    %129 = arith.negf %128 : vector<16x128xf32>
    %130 = math.exp %129 : vector<16x128xf32>
    %cst_36 = arith.constant 1.000000e+00 : f32
    %131 = vector.broadcast %cst_36 : f32 to vector<16x128xf32>
    %132 = arith.addf %131, %130 : vector<16x128xf32>
    %133 = arith.divf %131, %132 : vector<16x128xf32>
    %134 = vector.extract_strided_slice %123 {offsets = [0, 128], sizes = [16, 128], strides = [1, 1]} : vector<16x384xf32> to vector<16x128xf32>
    %135 = vector.extract_strided_slice %125 {offsets = [0, 128], sizes = [16, 128], strides = [1, 1]} : vector<16x384xf32> to vector<16x128xf32>
    %136 = arith.addf %134, %135 : vector<16x128xf32>
    %137 = arith.negf %136 : vector<16x128xf32>
    %138 = math.exp %137 : vector<16x128xf32>
    %cst_37 = arith.constant 1.000000e+00 : f32
    %139 = vector.broadcast %cst_37 : f32 to vector<16x128xf32>
    %140 = arith.addf %139, %138 : vector<16x128xf32>
    %141 = arith.divf %139, %140 : vector<16x128xf32>
    %142 = vector.extract_strided_slice %123 {offsets = [0, 256], sizes = [16, 128], strides = [1, 1]} : vector<16x384xf32> to vector<16x128xf32>
    %143 = vector.extract_strided_slice %125 {offsets = [0, 256], sizes = [16, 128], strides = [1, 1]} : vector<16x384xf32> to vector<16x128xf32>
    %144 = arith.addf %143, %15 : vector<16x128xf32>
    %145 = arith.mulf %133, %144 : vector<16x128xf32>
    %146 = arith.addf %142, %145 : vector<16x128xf32>
    %147 = math.tanh %146 : vector<16x128xf32>
    %cst_38 = arith.constant 1.000000e+00 : f32
    %148 = vector.broadcast %cst_38 : f32 to vector<16x128xf32>
    %149 = arith.subf %148, %141 : vector<16x128xf32>
    %150 = arith.mulf %149, %147 : vector<16x128xf32>
    %151 = arith.mulf %141, %118 : vector<16x128xf32>
    %152 = arith.addf %150, %151 : vector<16x128xf32>
    %c4_i32 = arith.constant 4 : i32
    %c0_39 = arith.constant 0 : index
    %c0_40 = arith.constant 0 : index
    %153 = vector.load %arg11[%c0_39, %c0_40] : memref<16x128xf32, #tpu.memory_space<vmem>>, vector<16x128xf32>
    tpu.vector_store %arg11[%c0_39, %c0_40], %152 {strides = array<i32>} : memref<16x128xf32, #tpu.memory_space<vmem>>, vector<16x128xf32>,
    %c1_i32_41 = arith.constant 1 : i32
    %154 = arith.cmpi eq, %arg1, %c1_i32_41 : i32
    %155 = arith.extui %154 : i1 to i32
    %c0_i32_42 = arith.constant 0 : i32
    %156 = arith.cmpi ne, %155, %c0_i32_42 : i32
    scf.if %156 {
      %157 = arith.truncf %152 : vector<16x128xf32> to vector<16x128xbf16>
      %c0_43 = arith.constant 0 : index
      %c0_44 = arith.constant 0 : index
      %158 = vector.load %arg7[%c0_43, %c0_44] : memref<128x128xbf16, #tpu.memory_space<vmem>>, vector<128x128xbf16>
      %cst_45 = arith.constant dense<0.000000e+00> : vector<16x128xf32>
      %159 = tpu.matmul %157, %158, %cst_45 {dimension_numbers = #tpu.dot_dimension_numbers<[1], [0], [0], [1], [0, 0, 1, 1], [], []>} : vector<16x128xbf16>, vector<128x128xbf16>, vector<16x128xf32> -> vector<16x128xf32>
      %c0_46 = arith.constant 0 : index
      %c0_47 = arith.constant 0 : index
      %160 = vector.load %arg8[%c0_46, %c0_47] : memref<1x128xf32, #tpu.memory_space<vmem>>, vector<1x128xf32>
      %161 = vector.broadcast %160 : vector<1x128xf32> to vector<16x128xf32>
      %162 = arith.addf %159, %161 : vector<16x128xf32>
      %c0_48 = arith.constant 0 : index
      %c0_49 = arith.constant 0 : index
      %163 = vector.load %arg9[%c0_48, %c0_49] : memref<16x128xf32, #tpu.memory_space<vmem>>, vector<16x128xf32>
      tpu.vector_store %arg9[%c0_48, %c0_49], %162 {strides = array<i32>} : memref<16x128xf32, #tpu.memory_space<vmem>>, vector<16x128xf32>,
    } else {
    }
    return
  }
  func.func @transform_0(%arg0: i32, %arg1: i32) -> (i32, i32, i32) {
    %c0_i32 = arith.constant 0 : i32
    %c0_i32_0 = arith.constant 0 : i32
    return %arg0, %arg1, %c0_i32 : i32, i32, i32
  }
  func.func @transform_1(%arg0: i32, %arg1: i32) -> (i32, i32) {
    %c0_i32 = arith.constant 0 : i32
    %c0_i32_0 = arith.constant 0 : i32
    %c0_i32_1 = arith.constant 0 : i32
    return %c0_i32, %c0_i32_0 : i32, i32
  }
  func.func @transform_2(%arg0: i32, %arg1: i32) -> (i32, i32) {
    %c0_i32 = arith.constant 0 : i32
    %c0_i32_0 = arith.constant 0 : i32
    %c0_i32_1 = arith.constant 0 : i32
    return %c0_i32, %c0_i32_0 : i32, i32
  }
  func.func @transform_3(%arg0: i32, %arg1: i32) -> (i32, i32) {
    %c0_i32 = arith.constant 0 : i32
    %c0_i32_0 = arith.constant 0 : i32
    %c0_i32_1 = arith.constant 0 : i32
    return %c0_i32, %c0_i32_0 : i32, i32
  }
  func.func @transform_4(%arg0: i32, %arg1: i32) -> (i32, i32) {
    %c0_i32 = arith.constant 0 : i32
    %c0_i32_0 = arith.constant 0 : i32
    %c0_i32_1 = arith.constant 0 : i32
    return %c0_i32, %c0_i32_0 : i32, i32
  }
  func.func @transform_5(%arg0: i32, %arg1: i32) -> (i32, i32) {
    %c0_i32 = arith.constant 0 : i32
    %c0_i32_0 = arith.constant 0 : i32
    %c0_i32_1 = arith.constant 0 : i32
    return %c0_i32, %c0_i32_0 : i32, i32
  }
  func.func @transform_6(%arg0: i32, %arg1: i32) -> (i32, i32) {
    %c0_i32 = arith.constant 0 : i32
    %c0_i32_0 = arith.constant 0 : i32
    %c0_i32_1 = arith.constant 0 : i32
    return %c0_i32, %c0_i32_0 : i32, i32
  }
  func.func @transform_7(%arg0: i32, %arg1: i32) -> (i32, i32) {
    %c0_i32 = arith.constant 0 : i32
    %c0_i32_0 = arith.constant 0 : i32
    return %arg0, %c0_i32 : i32, i32
  }
}

</mosaic_0001>

<llo_original>
// kernel: rnn_encoder_forward.1
$region0: #{rnn_encoder_forward.1}
  #allocation0 [shape = 'u32[]', space=smem, size = 0x4, offset = 0x4, fixed_abs, tag = 'smem constant byte address 0x4 - core index']
  #allocation1 [shape = 'u32[144,128]{1,0:T(1,128)}', space=vmem, size = 0x12000, scoped, tag = 'internal scratch']
  #allocation2 [shape = 'bf16[64,384]{1,0:T(16,128)(2,1)}', space=vmem, size = 0xc000, scoped, tag = 'scratch operand']
  #allocation3 [shape = 'f32[16,128]{1,0:T(8,128)}', space=vmem, size = 0x2000, scoped, tag = 'scratch operand']
  %s0 = inlined_call_operand.vmem [shape: bf16[1,128,5], index: 0, kind: input, shape index: {}]
  %s1 = inlined_call_operand.vmem [shape: bf16[5,384], index: 1, kind: input, shape index: {}]
  %s2 = inlined_call_operand.vmem [shape: bf16[128,384], index: 2, kind: input, shape index: {}]
  %s3 = inlined_call_operand.vmem [shape: f32[1,384], index: 3, kind: input, shape index: {}]
  %s4 = inlined_call_operand.vmem [shape: f32[1,128], index: 4, kind: input, shape index: {}]
  %s5 = inlined_call_operand.hbm [shape: bf16[128,128], index: 5, kind: input, shape index: {}]
  %s6 = inlined_call_operand.vmem [shape: f32[1,128], index: 6, kind: input, shape index: {}]
  %s7 = inlined_call_operand.vmem [shape: f32[16,128], index: 7, kind: output, shape index: {}]
  %s8 = sld [smem:[#allocation0]]
  $region73: #{rnn_encoder_forward.1} parent=0
    _
  %s10 = ssub.s32 1, %s8
  %s11 = scalar_select 0, %s10, %s8
  $region1: #{rnn_encoder_forward.1} parent=0
    #allocation4 [shape = 'u8[32768]{0}', space=vmem, size = 0x8000, scoped, tag = 'input window, operand 5, single buffered']
    #allocation5 [shape = 's32[2]{0}', space=sflag, size = 0x8, scoped, tag = 'scoped memory for rnn_encoder_forward.1']
    %12 = vsyncpa [#allocation5], 0
    loop: start=0, step=1, limit=4
    $region2: #{rnn_encoder_forward.1} parent=1 // loop_pre_header
      _
    $region3: #{rnn_encoder_forward.1} parent=1 // loop_header
      %s14 = sphi 0, %s18
      %p15 = scmp.ge.s32.totalorder %s14, 4
      %s21 = sphi 0, %s33
      %s22 = sphi 0, %s29
      %s23 = sphi 0, %s21
      %s24 = sphi 0, %s22
      %s25 = sphi 0, %s23
      %s26 = sphi 0, %s24
      %s38 = sphi 0, %s40
      %s41 = sphi 0, %s38
      %s42 = sphi 0, %s41
      %s58 = sphi 0, %s42
      %s62 = sphi 0, %s62
      %s64 = sphi 0, %s62
      %s65 = sphi 0, %s64
      %s79 = sphi 0, %s65
      %s83 = sphi 0, %s83
      %s85 = sphi 0, %s83
      %s86 = sphi 0, %s85
      %s100 = sphi 0, %s86
      %s104 = sphi 0, %s104
      %s106 = sphi 0, %s104
      %s107 = sphi 0, %s106
      %s121 = sphi 0, %s107
      %s125 = sphi 0, %s125
      %s127 = sphi 0, %s125
      %s128 = sphi 0, %s127
      %s142 = sphi 0, %s128
      %s146 = sphi 0, %s146
      %s148 = sphi 0, %s146
      %s149 = sphi 0, %s148
      %s163 = sphi 0, %s149
      %s167 = sphi 0, %s167
      %s169 = sphi 0, %s167
      %s170 = sphi 0, %s169
      %s184 = sphi 0, %s170
      %s190 = sphi 0, %s192
      %s193 = sphi 0, %s190
      %s194 = sphi 0, %s193
      %s210 = sphi 0, %s194
    $region4: #{rnn_encoder_forward.1} parent=1 // loop_header_branch
      %17 = sbr.rel (%p15) target = $region8
    $region5: #{rnn_encoder_forward.1} parent=1 // loop_body
      %s19 = ssub.s32 %s14, 1
      %s20 = ssub.s32 %s14, 2
      %s27 = sadd.s32 1, %s22
      %p28 = scmp.ge.s32.totalorder %s27, 2
      %s29 = scalar_select %p28, 0, %s27
      %s30 = sadd.s32 1, %s21
      %s31 = scalar_select %p28, %s30, %s21
      %p32 = scmp.ge.s32.totalorder %s31, 1
      %s33 = scalar_select %p32, 0, %s31
      %s34 = ssub.s32 %s21, %s33
      %s35 = ssub.s32 %s22, %s29
      %s36 = sor.u32 %s34, %s35
      %p37 = scmp.eq.s32.totalorder %s36, 0
      %s39 = sadd.s32 %s38, 1
      %s40 = scalar_select %p37, %s38, %s39
      %p43 = pneg %p37
      %p44 = scmp.eq.s32.totalorder %s14, 1
      %p45 = por %p43, %p44
      %p46 = scmp.ne.s32.totalorder %s38, %s41
      %p47 = scmp.eq.s32.totalorder %s14, 0
      %p48 = por %p46, %p47
      %p49 = scmp.ne.s32.totalorder %s38, %s41
      %p50 = scmp.eq.s32.totalorder %s19, 1
      %p51 = por %p49, %p50
      %p52 = scmp.ne.s32.totalorder %s41, %s42
      %p53 = scmp.eq.s32.totalorder %s19, 0
      %p54 = por %p52, %p53
      %p55 = scmp.ne.s32.totalorder %s41, %s42
      %p56 = scmp.eq.s32.totalorder %s20, 1
      %p57 = por %p55, %p56
      %p59 = scmp.ne.s32.totalorder %s42, %s58
      %p60 = scmp.eq.s32.totalorder %s20, 0
      %p61 = por %p59, %p60
      %s63 = sadd.s32 %s62, 1
      %p66 = scmp.eq.s32.totalorder %s14, 1
      %p67 = scmp.ne.s32.totalorder %s62, %s64
      %p68 = scmp.eq.s32.totalorder %s14, 0
      %p69 = por %p67, %p68
      %p70 = scmp.ne.s32.totalorder %s62, %s64
      %p71 = scmp.eq.s32.totalorder %s19, 1
      %p72 = por %p70, %p71
      %p73 = scmp.ne.s32.totalorder %s64, %s65
      %p74 = scmp.eq.s32.totalorder %s19, 0
      %p75 = por %p73, %p74
      %p76 = scmp.ne.s32.totalorder %s64, %s65
      %p77 = scmp.eq.s32.totalorder %s20, 1
      %p78 = por %p76, %p77
      %p80 = scmp.ne.s32.totalorder %s65, %s79
      %p81 = scmp.eq.s32.totalorder %s20, 0
      %p82 = por %p80, %p81
      %s84 = sadd.s32 %s83, 1
      %p87 = scmp.eq.s32.totalorder %s14, 1
      %p88 = scmp.ne.s32.totalorder %s83, %s85
      %p89 = scmp.eq.s32.totalorder %s14, 0
      %p90 = por %p88, %p89
      %p91 = scmp.ne.s32.totalorder %s83, %s85
      %p92 = scmp.eq.s32.totalorder %s19, 1
      %p93 = por %p91, %p92
      %p94 = scmp.ne.s32.totalorder %s85, %s86
      %p95 = scmp.eq.s32.totalorder %s19, 0
      %p96 = por %p94, %p95
      %p97 = scmp.ne.s32.totalorder %s85, %s86
      %p98 = scmp.eq.s32.totalorder %s20, 1
      %p99 = por %p97, %p98
      %p101 = scmp.ne.s32.totalorder %s86, %s100
      %p102 = scmp.eq.s32.totalorder %s20, 0
      %p103 = por %p101, %p102
      %s105 = sadd.s32 %s104, 1
      %p108 = scmp.eq.s32.totalorder %s14, 1
      %p109 = scmp.ne.s32.totalorder %s104, %s106
      %p110 = scmp.eq.s32.totalorder %s14, 0
      %p111 = por %p109, %p110
      %p112 = scmp.ne.s32.totalorder %s104, %s106
      %p113 = scmp.eq.s32.totalorder %s19, 1
      %p114 = por %p112, %p113
      %p115 = scmp.ne.s32.totalorder %s106, %s107
      %p116 = scmp.eq.s32.totalorder %s19, 0
      %p117 = por %p115, %p116
      %p118 = scmp.ne.s32.totalorder %s106, %s107
      %p119 = scmp.eq.s32.totalorder %s20, 1
      %p120 = por %p118, %p119
      %p122 = scmp.ne.s32.totalorder %s107, %s121
      %p123 = scmp.eq.s32.totalorder %s20, 0
      %p124 = por %p122, %p123
      %s126 = sadd.s32 %s125, 1
      %p129 = scmp.eq.s32.totalorder %s14, 1
      %p130 = scmp.ne.s32.totalorder %s125, %s127
      %p131 = scmp.eq.s32.totalorder %s14, 0
      %p132 = por %p130, %p131
      %p133 = scmp.ne.s32.totalorder %s125, %s127
      %p134 = scmp.eq.s32.totalorder %s19, 1
      %p135 = por %p133, %p134
      %p136 = scmp.ne.s32.totalorder %s127, %s128
      %p137 = scmp.eq.s32.totalorder %s19, 0
      %p138 = por %p136, %p137
      %p139 = scmp.ne.s32.totalorder %s127, %s128
      %p140 = scmp.eq.s32.totalorder %s20, 1
      %p141 = por %p139, %p140
      %p143 = scmp.ne.s32.totalorder %s128, %s142
      %p144 = scmp.eq.s32.totalorder %s20, 0
      %p145 = por %p143, %p144
      %s147 = sadd.s32 %s146, 1
      %p150 = scmp.eq.s32.totalorder %s14, 1
      %p151 = scmp.ne.s32.totalorder %s146, %s148
      %p152 = scmp.eq.s32.totalorder %s14, 0
      %p153 = por %p151, %p152
      %p154 = scmp.ne.s32.totalorder %s146, %s148
      %p155 = scmp.eq.s32.totalorder %s19, 1
      %p156 = por %p154, %p155
      %p157 = scmp.ne.s32.totalorder %s148, %s149
      %p158 = scmp.eq.s32.totalorder %s19, 0
      %p159 = por %p157, %p158
      %p160 = scmp.ne.s32.totalorder %s148, %s149
      %p161 = scmp.eq.s32.totalorder %s20, 1
      %p162 = por %p160, %p161
      %p164 = scmp.ne.s32.totalorder %s149, %s163
      %p165 = scmp.eq.s32.totalorder %s20, 0
      %p166 = por %p164, %p165
      %s168 = sadd.s32 %s167, 1
      %p171 = scmp.eq.s32.totalorder %s14, 1
      %p172 = scmp.ne.s32.totalorder %s167, %s169
      %p173 = scmp.eq.s32.totalorder %s14, 0
      %p174 = por %p172, %p173
      %p175 = scmp.ne.s32.totalorder %s167, %s169
      %p176 = scmp.eq.s32.totalorder %s19, 1
      %p177 = por %p175, %p176
      %p178 = scmp.ne.s32.totalorder %s169, %s170
      %p179 = scmp.eq.s32.totalorder %s19, 0
      %p180 = por %p178, %p179
      %p181 = scmp.ne.s32.totalorder %s169, %s170
      %p182 = scmp.eq.s32.totalorder %s20, 1
      %p183 = por %p181, %p182
      %p185 = scmp.ne.s32.totalorder %s170, %s184
      %p186 = scmp.eq.s32.totalorder %s20, 0
      %p187 = por %p185, %p186
      %s188 = ssub.s32 %s21, %s33
      %p189 = scmp.eq.s32.totalorder %s188, 0
      %s191 = sadd.s32 %s190, 1
      %s192 = scalar_select %p189, %s190, %s191
      %p195 = pneg %p189
      %p196 = scmp.eq.s32.totalorder %s14, 1
      %p197 = por %p195, %p196
      %p198 = scmp.ne.s32.totalorder %s190, %s193
      %p199 = scmp.eq.s32.totalorder %s14, 0
      %p200 = por %p198, %p199
      %p201 = scmp.ne.s32.totalorder %s190, %s193
      %p202 = scmp.eq.s32.totalorder %s19, 1
      %p203 = por %p201, %p202
      %p204 = scmp.ne.s32.totalorder %s193, %s194
      %p205 = scmp.eq.s32.totalorder %s19, 0
      %p206 = por %p204, %p205
      %p207 = scmp.ne.s32.totalorder %s193, %s194
      %p208 = scmp.eq.s32.totalorder %s20, 1
      %p209 = por %p207, %p208
      %p211 = scmp.ne.s32.totalorder %s194, %s210
      %p212 = scmp.eq.s32.totalorder %s20, 0
      %p213 = por %p211, %p212
      %p214 = scmp.le.s32.totalorder 1, %s14
      %p215 = scmp.lt.s32.totalorder %s14, 3
      %p216 = pnand %p214, %p215
      %p217 = pneg %p216
      // Predicated region
      $region9: #{rnn_encoder_forward.1} parent=5 // pred_check
        _
      $region10: #{rnn_encoder_forward.1} parent=5 // pred_check_branch
        %219 = sbr.rel (%p216) target = $region12
      $region11: #{rnn_encoder_forward.1} parent=5 // pred_region
        %s220 = ssub.s32 %s14, 1
        // Predicated region
        $region13: #{rnn_encoder_forward.1} parent=11 // pred_check
          %p221 = pneg %p75
        $region14: #{rnn_encoder_forward.1} parent=11 // pred_check_branch
          %223 = sbr.rel (%p221) target = $region16
        $region15: #{rnn_encoder_forward.1} parent=11 // pred_region
          _
        $region16: #{rnn_encoder_forward.1} parent=11 // pred_fallthru
          _
        // Predicated region
        $region17: #{rnn_encoder_forward.1} parent=11 // pred_check
          %p224 = pneg %p96
        $region18: #{rnn_encoder_forward.1} parent=11 // pred_check_branch
          %226 = sbr.rel (%p224) target = $region20
        $region19: #{rnn_encoder_forward.1} parent=11 // pred_region
          _
        $region20: #{rnn_encoder_forward.1} parent=11 // pred_fallthru
          _
        // Predicated region
        $region21: #{rnn_encoder_forward.1} parent=11 // pred_check
          %p227 = pneg %p117
        $region22: #{rnn_encoder_forward.1} parent=11 // pred_check_branch
          %229 = sbr.rel (%p227) target = $region24
        $region23: #{rnn_encoder_forward.1} parent=11 // pred_region
          _
        $region24: #{rnn_encoder_forward.1} parent=11 // pred_fallthru
          _
        // Predicated region
        $region25: #{rnn_encoder_forward.1} parent=11 // pred_check
          %p230 = pneg %p138
        $region26: #{rnn_encoder_forward.1} parent=11 // pred_check_branch
          %232 = sbr.rel (%p230) target = $region28
        $region27: #{rnn_encoder_forward.1} parent=11 // pred_region
          _
        $region28: #{rnn_encoder_forward.1} parent=11 // pred_fallthru
          _
        // Predicated region
        $region29: #{rnn_encoder_forward.1} parent=11 // pred_check
          %p233 = pneg %p159
        $region30: #{rnn_encoder_forward.1} parent=11 // pred_check_branch
          %235 = sbr.rel (%p233) target = $region32
        $region31: #{rnn_encoder_forward.1} parent=11 // pred_region
          %s237 = ssub.s32 1024, 1024
          %238 = vsyncadd [#allocation5], %s237
          %s239 = sshll.u32 [#allocation4], 4
          %s240 = int_to_ptr.vmem [resolvable:$true] %s239
          %245 = dma.hbm_to_vmem [thread:$0]  %s5, 1024, %s240, [#allocation5], 64, 64, 4
        $region32: #{rnn_encoder_forward.1} parent=11 // pred_fallthru
          _
        // Predicated region
        $region33: #{rnn_encoder_forward.1} parent=11 // pred_check
          %p246 = pneg %p180
        $region34: #{rnn_encoder_forward.1} parent=11 // pred_check_branch
          %248 = sbr.rel (%p246) target = $region36
        $region35: #{rnn_encoder_forward.1} parent=11 // pred_region
          _
        $region36: #{rnn_encoder_forward.1} parent=11 // pred_fallthru
          _
      $region12: #{rnn_encoder_forward.1} parent=5 // pred_fallthru
        _
      %p249 = scmp.lt.s32.totalorder %s14, 2
      // Predicated region
      $region37: #{rnn_encoder_forward.1} parent=5 // pred_check
        %p250 = pneg %p249
      $region38: #{rnn_encoder_forward.1} parent=5 // pred_check_branch
        %252 = sbr.rel (%p250) target = $region40
      $region39: #{rnn_encoder_forward.1} parent=5 // pred_region
        // Predicated region
        $region41: #{rnn_encoder_forward.1} parent=39 // pred_check
          %p253 = pneg %p48
        $region42: #{rnn_encoder_forward.1} parent=39 // pred_check_branch
          %255 = sbr.rel (%p253) target = $region44
        $region43: #{rnn_encoder_forward.1} parent=39 // pred_region
          %s256 = smul.u32 8, %s22
          %p257 = scmp.lt.s32.totalorder %s21, 0
          %s258 = scalar_select %p257, %s21, 0
          %p259 = scmp.lt.s32.totalorder %s256, 15
          %s260 = scalar_select %p259, %s256, 15
          %s261 = smul.addr %s258, 16
          %s262 = sadd.s32 %s260, %s261
          %s263 = smul.addr %s262, 4
          %s264 = scalar_lea.vmem %s0, %s263
          %s265 = smul.u32 8, %s22
        $region44: #{rnn_encoder_forward.1} parent=39 // pred_fallthru
          _
      $region40: #{rnn_encoder_forward.1} parent=5 // pred_fallthru
        _
      %p266 = scmp.le.s32.totalorder 1, %s14
      %p267 = scmp.lt.s32.totalorder %s14, 3
      %p268 = pnand %p266, %p267
      %p269 = pneg %p268
      // Predicated region
      $region45: #{rnn_encoder_forward.1} parent=5 // pred_check
        _
      $region46: #{rnn_encoder_forward.1} parent=5 // pred_check_branch
        %271 = sbr.rel (%p268) target = $region48
      $region47: #{rnn_encoder_forward.1} parent=5 // pred_region
        %s272 = ssub.s32 %s14, 1
        // Predicated region
        $region49: #{rnn_encoder_forward.1} parent=47 // pred_check
          %p273 = pneg %p159
        $region50: #{rnn_encoder_forward.1} parent=47 // pred_check_branch
          %275 = sbr.rel (%p273) target = $region52
        $region51: #{rnn_encoder_forward.1} parent=47 // pred_region
          %276 = dma.done [#allocation5], 1024
        $region52: #{rnn_encoder_forward.1} parent=47 // pred_fallthru
          _
        %s277 = smul.u32 8, %s24
        %p278 = scmp.lt.s32.totalorder %s23, 0
        %s279 = scalar_select %p278, %s23, 0
        %p280 = scmp.lt.s32.totalorder %s277, 15
        %s281 = scalar_select %p280, %s277, 15
        %s282 = smul.addr %s279, 16
        %s283 = sadd.s32 %s281, %s282
        %s284 = smul.addr %s283, 4
        %s285 = scalar_lea.vmem %s0, %s284
        %p286 = pneg %p54
        %p287 = pneg %p51
        %p288 = pneg %p75
        %p289 = pneg %p72
        %p290 = pneg %p96
        %p291 = pneg %p93
        %p292 = pneg %p117
        %p293 = pneg %p114
        %p294 = pneg %p138
        %p295 = pneg %p135
        %p296 = pneg %p159
        %p297 = pneg %p156
        %p298 = pneg %p180
        %p299 = pneg %p177
        %p300 = pneg %p206
        %p301 = pneg %p203
        %s302 = smul.u32 2, %s23
        %p303 = scmp.lt.s32.totalorder %s302, 1
        %s304 = scalar_select %p303, %s302, 1
        %s305 = smul.addr %s304, 8
        %s306 = scalar_lea.vmem %s7, %s305
        %s307 = smul.u32 8, %s24
        %p308 = scmp.lt.s32.totalorder %s23, 0
        %s309 = scalar_select %p308, %s23, 0
        %p310 = scmp.lt.s32.totalorder %s307, 15
        %s311 = scalar_select %p310, %s307, 15
        %s312 = smul.addr %s309, 16
        %s313 = sadd.s32 %s311, %s312
        %s314 = smul.addr %s313, 4
        %s315 = scalar_lea.vmem %s0, %s314
        %s316 = smul.u32 8, %s24
        %s317 = smul.u32 2, %s23
        %p318 = scmp.lt.s32.totalorder %s317, 1
        %s319 = scalar_select %p318, %s317, 1
        %s320 = smul.addr %s319, 8
        %s321 = scalar_lea.vmem %s7, %s320
        %s322 = smul.u32 2, %s23
        %p324 = scmp.eq.s32.totalorder %s24, 0
        // Predicated region
        $region53: #{rnn_encoder_forward.1} parent=47 // pred_check
          %p325 = pneg %p324
        $region54: #{rnn_encoder_forward.1} parent=47 // pred_check_branch
          %327 = sbr.rel (%p325) target = $region56
        $region55: #{rnn_encoder_forward.1} parent=47 // pred_region
          %328 = vst [vmem:[#allocation3] sm:$0xff] 0.0
          %329 = vst [vmem:[#allocation3 + $0x8] sm:$0xff] 0.0
        $region56: #{rnn_encoder_forward.1} parent=47 // pred_fallthru
          _
        %v330 = vld [vmem:[%s315] sm:$0xf]
        %v331 = vld [vmem:[%s315 + $0x4] sm:$0xf]
        %v332 = vld [vmem:[%s315 + $0x8] sm:$0xf]
        %v333 = vld [vmem:[%s315 + $0xc] sm:$0xf]
        %v334 = vld [vmem:[%s315 + $0x10] sm:$0xf]
        %v335 = vld [vmem:[%s315 + $0x14] sm:$0xf]
        %v336 = vld [vmem:[%s315 + $0x18] sm:$0xf]
        %v337 = vld [vmem:[%s315 + $0x1c] sm:$0xf]
        %v338 = vld [vmem:[%s1] sm:$0x77]
        %v339 = vld [vmem:[%s1 + $0x8] sm:$0x7]
        %v340 = vld [vmem:[%s3] sm:$0x7]
        %v342 = vlaneseq
        %v343 = vshrl.u32 %v342, 7
        %v344 = vsub.s32 0, %v343
        %v345 = vrot.slane %v340, %v344
        %v346 = vlaneseq
        %v347 = vshrl.u32 %v346, 7
        %v348 = vsub.s32 1, %v347
        %v349 = vrot.slane %v340, %v348
        %v350 = vlaneseq
        %v351 = vshrl.u32 %v350, 7
        %v352 = vsub.s32 2, %v351
        %v353 = vrot.slane %v340, %v352
        %v365 = vunpack.c.l.b16 %v330
        %v366 = vunpack.c.l.b16 %v331
        %v367 = vunpack.c.l.b16 %v332
        %v368 = vunpack.c.l.b16 %v333
        %v369 = vunpack.c.l.b16 %v334
        %v370 = vunpack.c.l.b16 %v335
        %v371 = vunpack.c.l.b16 %v336
        %v372 = vunpack.c.l.b16 %v337
        %v373 = vpack.c.b16 %v366, %v365
        %v374 = vpack.c.b16 %v368, %v367
        %v375 = vpack.c.b16 %v370, %v369
        %v376 = vpack.c.b16 %v372, %v371
        %v379 = vunpack.c.l.b16 %v338
        %v380 = vunpack.c.h.b16 %v338
        %v381 = vunpack.c.l.b16 %v339
        %v382 = vpack.c.b16 %v379, %v379
        %v383 = vpack.c.b16 %v380, %v380
        %v384 = vpack.c.b16 %v381, %v381
        %vm385 = vcmask 39936
        %v387 = vsel %vm385, %v373, 0
        %v390 = vsel %vm385, %v374, 0
        %v393 = vsel %vm385, %v375, 0
        %v396 = vsel %vm385, %v376, 0
        %vm398 = vcmask 1041408
        %vm399 = vcmask 1042432
        %v400 = vsel %vm398, 4294967295, 65535
        %v401 = vsel %vm399, %v400, 0
        %v403 = vand.u32 %v382, %v401
        %v406 = vand.u32 %v383, %v401
        %v409 = vand.u32 %v384, %v401
        %411 = vmatprep.subr.bf16.mxu0 %v406
        %412 = vmatpush1.bf16.msra.mxu0 %v403
        %413 = vmatprep.subr.bf16.mxu0 0
        %414 = vmatpush1.bf16.msra.mxu0 0
        %415 = vmatprep.subr.bf16.mxu0 0
        %416 = vmatpush1.bf16.msra.mxu0 0
        %417 = vmatprep.subr.bf16.mxu0 0
        %418 = vmatpush1.bf16.msra.mxu0 0
        %419 = vmatprep.subr.bf16.mxu0 0
        %420 = vmatpush1.bf16.msra.mxu0 0
        %421 = vmatprep.subr.bf16.mxu0 0
        %422 = vmatpush1.bf16.msra.mxu0 0
        %423 = vmatprep.subr.bf16.mxu0 0
        %424 = vmatpush1.bf16.msra.mxu0 0
        %425 = vmatprep.subr.bf16.mxu0 0
        %426 = vmatpush1.bf16.msra.mxu0 0
        %427 = vmatprep.subr.bf16.mxu0 0
        %428 = vmatpush1.bf16.msra.mxu0 0
        %429 = vmatprep.subr.bf16.mxu0 0
        %430 = vmatpush1.bf16.msra.mxu0 0
        %431 = vmatprep.subr.bf16.mxu0 0
        %432 = vmatpush1.bf16.msra.mxu0 0
        %433 = vmatprep.subr.bf16.mxu0 0
        %434 = vmatpush1.bf16.msra.mxu0 0
        %435 = vmatprep.subr.bf16.mxu0 0
        %436 = vmatpush1.bf16.msra.mxu0 0
        %437 = vmatprep.subr.bf16.mxu0 0
        %438 = vmatpush1.bf16.msra.mxu0 0
        %439 = vmatprep.subr.bf16.mxu0 0
        %440 = vmatpush1.bf16.msra.mxu0 0
        %441 = vmatprep.subr.bf16.mxu0 0
        %442 = vmatpush1.bf16.msra.mxu0 0
        %443 = vmatprep.mubr.bf16.mxu0 0
        %444 = vmatmul.mubr.bf16.gmra.mrb[0].mxu0 %v387
        %v445 = vpop.f32.mrb[0].mxu0
        %v446 = vadd.f32 %v345, %v445
        %v447 = vpop.f32.mrb[0].mxu0
        %v448 = vadd.f32 %v349, %v447
        %v449 = vpop.f32.mrb[0].mxu0
        %v450 = vadd.f32 %v345, %v449
        %v451 = vpop.f32.mrb[0].mxu0
        %v452 = vadd.f32 %v349, %v451
        %453 = vmatprep.mubr.bf16.mxu0 0
        %454 = vmatmul.mubr.bf16.gmra.mrb[0].mxu0 %v390
        %v455 = vpop.f32.mrb[0].mxu0
        %v456 = vadd.f32 %v345, %v455
        %v457 = vpop.f32.mrb[0].mxu0
        %v458 = vadd.f32 %v349, %v457
        %v459 = vpop.f32.mrb[0].mxu0
        %v460 = vadd.f32 %v345, %v459
        %v461 = vpop.f32.mrb[0].mxu0
        %v462 = vadd.f32 %v349, %v461
        %463 = vmatprep.mubr.bf16.mxu0 0
        %464 = vmatmul.mubr.bf16.gmra.mrb[0].mxu0 %v393
        %v465 = vpop.f32.mrb[0].mxu0
        %v466 = vadd.f32 %v345, %v465
        %v467 = vpop.f32.mrb[0].mxu0
        %v468 = vadd.f32 %v349, %v467
        %v469 = vpop.f32.mrb[0].mxu0
        %v470 = vadd.f32 %v345, %v469
        %v471 = vpop.f32.mrb[0].mxu0
        %v472 = vadd.f32 %v349, %v471
        %473 = vmatprep.mubr.bf16.mxu0 0
        %474 = vmatmul.mubr.bf16.gmra.mrb[0].mxu0 %v396
        %v475 = vpop.f32.mrb[0].mxu0
        %v476 = vadd.f32 %v345, %v475
        %v477 = vpop.f32.mrb[0].mxu0
        %v478 = vadd.f32 %v349, %v477
        %v479 = vpop.f32.mrb[0].mxu0
        %v480 = vadd.f32 %v345, %v479
        %v481 = vpop.f32.mrb[0].mxu0
        %v482 = vadd.f32 %v349, %v481
        %483 = vdwg.mxu0
        %484 = vmatprep.subr.bf16.mxu0 0
        %485 = vmatpush1.bf16.msra.mxu0 %v409
        %486 = vmatprep.subr.bf16.mxu0 0
        %487 = vmatpush1.bf16.msra.mxu0 0
        %488 = vmatprep.subr.bf16.mxu0 0
        %489 = vmatpush1.bf16.msra.mxu0 0
        %490 = vmatprep.subr.bf16.mxu0 0
        %491 = vmatpush1.bf16.msra.mxu0 0
        %492 = vmatprep.subr.bf16.mxu0 0
        %493 = vmatpush1.bf16.msra.mxu0 0
        %494 = vmatprep.subr.bf16.mxu0 0
        %495 = vmatpush1.bf16.msra.mxu0 0
        %496 = vmatprep.subr.bf16.mxu0 0
        %497 = vmatpush1.bf16.msra.mxu0 0
        %498 = vmatprep.subr.bf16.mxu0 0
        %499 = vmatpush1.bf16.msra.mxu0 0
        %500 = vmatprep.subr.bf16.mxu0 0
        %501 = vmatpush1.bf16.msra.mxu0 0
        %502 = vmatprep.subr.bf16.mxu0 0
        %503 = vmatpush1.bf16.msra.mxu0 0
        %504 = vmatprep.subr.bf16.mxu0 0
        %505 = vmatpush1.bf16.msra.mxu0 0
        %506 = vmatprep.subr.bf16.mxu0 0
        %507 = vmatpush1.bf16.msra.mxu0 0
        %508 = vmatprep.subr.bf16.mxu0 0
        %509 = vmatpush1.bf16.msra.mxu0 0
        %510 = vmatprep.subr.bf16.mxu0 0
        %511 = vmatpush1.bf16.msra.mxu0 0
        %512 = vmatprep.subr.bf16.mxu0 0
        %513 = vmatpush1.bf16.msra.mxu0 0
        %514 = vmatprep.subr.bf16.mxu0 0
        %515 = vmatpush1.bf16.msra.mxu0 0
        %516 = vmatprep.mubr.bf16.mxu0 0
        %517 = vmatmul.mubr.bf16.gmra.mrb[0].mxu0 %v387
        %v518 = vpop.f32.mrb[0].mxu0
        %v519 = vadd.f32 %v353, %v518
        %v520 = vpop.f32.mrb[0].mxu0
        %v521 = vpop.f32.mrb[0].mxu0
        %v522 = vadd.f32 %v353, %v521
        %v523 = vpop.f32.mrb[0].mxu0
        %524 = vmatprep.mubr.bf16.mxu0 0
        %525 = vmatmul.mubr.bf16.gmra.mrb[0].mxu0 %v390
        %v526 = vpop.f32.mrb[0].mxu0
        %v527 = vadd.f32 %v353, %v526
        %v528 = vpop.f32.mrb[0].mxu0
        %v529 = vpop.f32.mrb[0].mxu0
        %v530 = vadd.f32 %v353, %v529
        %v531 = vpop.f32.mrb[0].mxu0
        %532 = vmatprep.mubr.bf16.mxu0 0
        %533 = vmatmul.mubr.bf16.gmra.mrb[0].mxu0 %v393
        %v534 = vpop.f32.mrb[0].mxu0
        %v535 = vadd.f32 %v353, %v534
        %v536 = vpop.f32.mrb[0].mxu0
        %v537 = vpop.f32.mrb[0].mxu0
        %v538 = vadd.f32 %v353, %v537
        %v539 = vpop.f32.mrb[0].mxu0
        %540 = vmatprep.mubr.bf16.mxu0 0
        %541 = vmatmul.mubr.bf16.gmra.mrb[0].mxu0 %v396
        %v542 = vpop.f32.mrb[0].mxu0
        %v543 = vadd.f32 %v353, %v542
        %v544 = vpop.f32.mrb[0].mxu0
        %v545 = vpop.f32.mrb[0].mxu0
        %v546 = vadd.f32 %v353, %v545
        %v547 = vpop.f32.mrb[0].mxu0
        %548 = vdwg.mxu0
        %v549 = vpack.c.bf16 %v450, %v446
        %v550 = vpack.c.bf16 %v452, %v448
        %v551 = vpack.c.bf16 %v522, %v519
        %v552 = vpack.c.bf16 %v460, %v456
        %v553 = vpack.c.bf16 %v462, %v458
        %v554 = vpack.c.bf16 %v530, %v527
        %v555 = vpack.c.bf16 %v470, %v466
        %v556 = vpack.c.bf16 %v472, %v468
        %v557 = vpack.c.bf16 %v538, %v535
        %v558 = vpack.c.bf16 %v480, %v476
        %v559 = vpack.c.bf16 %v482, %v478
        %v560 = vpack.c.bf16 %v546, %v543
        %561 = vst [vmem:[#allocation2] sm:$0xff] %v549
        %562 = vst [vmem:[#allocation2 + $0x8] sm:$0xff] %v550
        %563 = vst [vmem:[#allocation2 + $0x10] sm:$0xff] %v551
        %564 = vst [vmem:[#allocation2 + $0x18] sm:$0xff] %v552
        %565 = vst [vmem:[#allocation2 + $0x20] sm:$0xff] %v553
        %566 = vst [vmem:[#allocation2 + $0x28] sm:$0xff] %v554
        %567 = vst [vmem:[#allocation2 + $0x30] sm:$0xff] %v555
        %568 = vst [vmem:[#allocation2 + $0x38] sm:$0xff] %v556
        %569 = vst [vmem:[#allocation2 + $0x40] sm:$0xff] %v557
        %570 = vst [vmem:[#allocation2 + $0x48] sm:$0xff] %v558
        %571 = vst [vmem:[#allocation2 + $0x50] sm:$0xff] %v559
        %572 = vst [vmem:[#allocation2 + $0x58] sm:$0xff] %v560
        %v573 = vld [vmem:[%s2] sm:$0xff]
        %v574 = vld [vmem:[%s2 + $0x8] sm:$0xf]
        %v575 = vld [vmem:[%s2 + $0xc] sm:$0xff]
        %v576 = vld [vmem:[%s2 + $0x14] sm:$0xf]
        %v577 = vld [vmem:[%s2 + $0x18] sm:$0xff]
        %v578 = vld [vmem:[%s2 + $0x20] sm:$0xf]
        %v579 = vld [vmem:[%s2 + $0x24] sm:$0xff]
        %v580 = vld [vmem:[%s2 + $0x2c] sm:$0xf]
        %v581 = vld [vmem:[%s2 + $0x30] sm:$0xff]
        %v582 = vld [vmem:[%s2 + $0x38] sm:$0xf]
        %v583 = vld [vmem:[%s2 + $0x3c] sm:$0xff]
        %v584 = vld [vmem:[%s2 + $0x44] sm:$0xf]
        %v585 = vld [vmem:[%s2 + $0x48] sm:$0xff]
        %v586 = vld [vmem:[%s2 + $0x50] sm:$0xf]
        %v587 = vld [vmem:[%s2 + $0x54] sm:$0xff]
        %v588 = vld [vmem:[%s2 + $0x5c] sm:$0xf]
        %v589 = vld [vmem:[%s2 + $0x60] sm:$0xff]
        %v590 = vld [vmem:[%s2 + $0x68] sm:$0xf]
        %v591 = vld [vmem:[%s2 + $0x6c] sm:$0xff]
        %v592 = vld [vmem:[%s2 + $0x74] sm:$0xf]
        %v593 = vld [vmem:[%s2 + $0x78] sm:$0xff]
        %v594 = vld [vmem:[%s2 + $0x80] sm:$0xf]
        %v595 = vld [vmem:[%s2 + $0x84] sm:$0xff]
        %v596 = vld [vmem:[%s2 + $0x8c] sm:$0xf]
        %v597 = vld [vmem:[%s2 + $0x90] sm:$0xff]
        %v598 = vld [vmem:[%s2 + $0x98] sm:$0xf]
        %v599 = vld [vmem:[%s2 + $0x9c] sm:$0xff]
        %v600 = vld [vmem:[%s2 + $0xa4] sm:$0xf]
        %v601 = vld [vmem:[%s2 + $0xa8] sm:$0xff]
        %v602 = vld [vmem:[%s2 + $0xb0] sm:$0xf]
        %v603 = vld [vmem:[%s2 + $0xb4] sm:$0xff]
        %v604 = vld [vmem:[%s2 + $0xbc] sm:$0xf]
        %v605 = vld [vmem:[%s4] sm:$0x1]
        %v607 = vlaneseq
        %v608 = vshrl.u32 %v607, 7
        %v609 = vsub.s32 0, %v608
        %v610 = vrot.slane %v605, %v609
        %v612 = vld [vmem:[#allocation3] sm:$0xff]
        %v613 = vld [vmem:[#allocation3 + $0x8] sm:$0xff]
        %s614 = smul.u32 0, 3
        %s615 = smul.addr %s614, 8
        %s616 = scalar_lea.vmem [#allocation2], %s615
        %v617 = vld [vmem:[%s616] sm:$0xff]
        %v618 = vld [vmem:[%s616 + $0x8] sm:$0xff]
        %v619 = vld [vmem:[%s616 + $0x10] sm:$0xff]
        %v620 = vunpack.c.l.bf16 %v617
        %v621 = vunpack.c.l.bf16 %v618
        %v622 = vunpack.c.l.bf16 %v619
        %v623 = vunpack.c.h.bf16 %v617
        %v624 = vunpack.c.h.bf16 %v618
        %v625 = vunpack.c.h.bf16 %v619
        %v626 = vpack.c.bf16 %v613, %v612
        %v659 = vunpack.c.l.b16 %v573
        %v660 = vunpack.c.h.b16 %v573
        %v661 = vunpack.c.l.b16 %v574
        %v662 = vunpack.c.l.b16 %v575
        %v663 = vunpack.c.h.b16 %v575
        %v664 = vunpack.c.l.b16 %v576
        %v665 = vunpack.c.l.b16 %v577
        %v666 = vunpack.c.h.b16 %v577
        %v667 = vunpack.c.l.b16 %v578
        %v668 = vunpack.c.l.b16 %v579
        %v669 = vunpack.c.h.b16 %v579
        %v670 = vunpack.c.l.b16 %v580
        %v671 = vunpack.c.l.b16 %v581
        %v672 = vunpack.c.h.b16 %v581
        %v673 = vunpack.c.l.b16 %v582
        %v674 = vunpack.c.l.b16 %v583
        %v675 = vunpack.c.h.b16 %v583
        %v676 = vunpack.c.l.b16 %v584
        %v677 = vunpack.c.l.b16 %v585
        %v678 = vunpack.c.h.b16 %v585
        %v679 = vunpack.c.l.b16 %v586
        %v680 = vunpack.c.l.b16 %v587
        %v681 = vunpack.c.h.b16 %v587
        %v682 = vunpack.c.l.b16 %v588
        %v683 = vunpack.c.l.b16 %v589
        %v684 = vunpack.c.h.b16 %v589
        %v685 = vunpack.c.l.b16 %v590
        %v686 = vunpack.c.l.b16 %v591
        %v687 = vunpack.c.h.b16 %v591
        %v688 = vunpack.c.l.b16 %v592
        %v689 = vunpack.c.l.b16 %v593
        %v690 = vunpack.c.h.b16 %v593
        %v691 = vunpack.c.l.b16 %v594
        %v692 = vunpack.c.l.b16 %v595
        %v693 = vunpack.c.h.b16 %v595
        %v694 = vunpack.c.l.b16 %v596
        %v695 = vunpack.c.l.b16 %v597
        %v696 = vunpack.c.h.b16 %v597
        %v697 = vunpack.c.l.b16 %v598
        %v698 = vunpack.c.l.b16 %v599
        %v699 = vunpack.c.h.b16 %v599
        %v700 = vunpack.c.l.b16 %v600
        %v701 = vunpack.c.l.b16 %v601
        %v702 = vunpack.c.h.b16 %v601
        %v703 = vunpack.c.l.b16 %v602
        %v704 = vunpack.c.l.b16 %v603
        %v705 = vunpack.c.h.b16 %v603
        %v706 = vunpack.c.l.b16 %v604
        %v707 = vpack.c.b16 %v662, %v659
        %v708 = vpack.c.b16 %v663, %v660
        %v709 = vpack.c.b16 %v664, %v661
        %v710 = vpack.c.b16 %v668, %v665
        %v711 = vpack.c.b16 %v669, %v666
        %v712 = vpack.c.b16 %v670, %v667
        %v713 = vpack.c.b16 %v674, %v671
        %v714 = vpack.c.b16 %v675, %v672
        %v715 = vpack.c.b16 %v676, %v673
        %v716 = vpack.c.b16 %v680, %v677
        %v717 = vpack.c.b16 %v681, %v678
        %v718 = vpack.c.b16 %v682, %v679
        %v719 = vpack.c.b16 %v686, %v683
        %v720 = vpack.c.b16 %v687, %v684
        %v721 = vpack.c.b16 %v688, %v685
        %v722 = vpack.c.b16 %v692, %v689
        %v723 = vpack.c.b16 %v693, %v690
        %v724 = vpack.c.b16 %v694, %v691
        %v725 = vpack.c.b16 %v698, %v695
        %v726 = vpack.c.b16 %v699, %v696
        %v727 = vpack.c.b16 %v700, %v697
        %v728 = vpack.c.b16 %v704, %v701
        %v729 = vpack.c.b16 %v705, %v702
        %v730 = vpack.c.b16 %v706, %v703
        %755 = vmatprep.subr.bf16.mxu0 %v708
        %756 = vmatpush1.bf16.msra.mxu0 %v707
        %757 = vmatprep.subr.bf16.mxu0 %v711
        %758 = vmatpush1.bf16.msra.mxu0 %v710
        %759 = vmatprep.subr.bf16.mxu0 %v714
        %760 = vmatpush1.bf16.msra.mxu0 %v713
        %761 = vmatprep.subr.bf16.mxu0 %v717
        %762 = vmatpush1.bf16.msra.mxu0 %v716
        %763 = vmatprep.subr.bf16.mxu0 %v720
        %764 = vmatpush1.bf16.msra.mxu0 %v719
        %765 = vmatprep.subr.bf16.mxu0 %v723
        %766 = vmatpush1.bf16.msra.mxu0 %v722
        %767 = vmatprep.subr.bf16.mxu0 %v726
        %768 = vmatpush1.bf16.msra.mxu0 %v725
        %769 = vmatprep.subr.bf16.mxu0 %v729
        %770 = vmatpush1.bf16.msra.mxu0 %v728
        %771 = vmatprep.subr.bf16.mxu0 0
        %772 = vmatpush1.bf16.msra.mxu0 0
        %773 = vmatprep.subr.bf16.mxu0 0
        %774 = vmatpush1.bf16.msra.mxu0 0
        %775 = vmatprep.subr.bf16.mxu0 0
        %776 = vmatpush1.bf16.msra.mxu0 0
        %777 = vmatprep.subr.bf16.mxu0 0
        %778 = vmatpush1.bf16.msra.mxu0 0
        %779 = vmatprep.subr.bf16.mxu0 0
        %780 = vmatpush1.bf16.msra.mxu0 0
        %781 = vmatprep.subr.bf16.mxu0 0
        %782 = vmatpush1.bf16.msra.mxu0 0
        %783 = vmatprep.subr.bf16.mxu0 0
        %784 = vmatpush1.bf16.msra.mxu0 0
        %785 = vmatprep.subr.bf16.mxu0 0
        %786 = vmatpush1.bf16.msra.mxu0 0
        %787 = vmatprep.mubr.bf16.mxu0 0
        %788 = vmatmul.mubr.bf16.gmra.mrb[0].mxu0 %v626
        %v789 = vpop.f32.mrb[0].mxu0
        %v790 = vadd.f32 0.0, %v789
        %v791 = vpop.f32.mrb[0].mxu0
        %v792 = vadd.f32 0.0, %v791
        %v793 = vpop.f32.mrb[0].mxu0
        %v794 = vadd.f32 0.0, %v793
        %v795 = vpop.f32.mrb[0].mxu0
        %v796 = vadd.f32 0.0, %v795
        %797 = vdwg.mxu0
        %798 = vmatprep.subr.bf16.mxu0 0
        %799 = vmatpush1.bf16.msra.mxu0 %v709
        %800 = vmatprep.subr.bf16.mxu0 0
        %801 = vmatpush1.bf16.msra.mxu0 %v712
        %802 = vmatprep.subr.bf16.mxu0 0
        %803 = vmatpush1.bf16.msra.mxu0 %v715
        %804 = vmatprep.subr.bf16.mxu0 0
        %805 = vmatpush1.bf16.msra.mxu0 %v718
        %806 = vmatprep.subr.bf16.mxu0 0
        %807 = vmatpush1.bf16.msra.mxu0 %v721
        %808 = vmatprep.subr.bf16.mxu0 0
        %809 = vmatpush1.bf16.msra.mxu0 %v724
        %810 = vmatprep.subr.bf16.mxu0 0
        %811 = vmatpush1.bf16.msra.mxu0 %v727
        %812 = vmatprep.subr.bf16.mxu0 0
        %813 = vmatpush1.bf16.msra.mxu0 %v730
        %814 = vmatprep.subr.bf16.mxu0 0
        %815 = vmatpush1.bf16.msra.mxu0 0
        %816 = vmatprep.subr.bf16.mxu0 0
        %817 = vmatpush1.bf16.msra.mxu0 0
        %818 = vmatprep.subr.bf16.mxu0 0
        %819 = vmatpush1.bf16.msra.mxu0 0
        %820 = vmatprep.subr.bf16.mxu0 0
        %821 = vmatpush1.bf16.msra.mxu0 0
        %822 = vmatprep.subr.bf16.mxu0 0
        %823 = vmatpush1.bf16.msra.mxu0 0
        %824 = vmatprep.subr.bf16.mxu0 0
        %825 = vmatpush1.bf16.msra.mxu0 0
        %826 = vmatprep.subr.bf16.mxu0 0
        %827 = vmatpush1.bf16.msra.mxu0 0
        %828 = vmatprep.subr.bf16.mxu0 0
        %829 = vmatpush1.bf16.msra.mxu0 0
        %830 = vmatprep.mubr.bf16.mxu0 0
        %831 = vmatmul.mubr.bf16.gmra.mrb[0].mxu0 %v626
        %v832 = vpop.f32.mrb[0].mxu0
        %v833 = vadd.f32 0.0, %v832
        %v834 = vpop.f32.mrb[0].mxu0
        %v835 = vpop.f32.mrb[0].mxu0
        %v836 = vadd.f32 0.0, %v835
        %v837 = vpop.f32.mrb[0].mxu0
        %838 = vdwg.mxu0
        %v839 = vadd.f32 %v620, %v790
        %v840 = vadd.f32 %v623, %v794
        %v841 = vxor.u32 %v839, 2147483648
        %v842 = vxor.u32 %v840, 2147483648
        %v843 = vmul.f32 %v841, 1.442695
        %v844 = vpow.pop %v843
        %v845 = vmul.f32 %v842, 1.442695
        %v846 = vpow.pop %v845
        %v847 = vadd.f32 %v844, 1.0
        %v848 = vadd.f32 %v846, 1.0
        %v849 = vrcp.pop %v847
        %v850 = vmul.f32 1.0, %v849
        %v851 = vrcp.pop %v848
        %v852 = vmul.f32 1.0, %v851
        %v853 = vadd.f32 %v621, %v792
        %v854 = vadd.f32 %v624, %v796
        %v855 = vxor.u32 %v853, 2147483648
        %v856 = vxor.u32 %v854, 2147483648
        %v857 = vmul.f32 %v855, 1.442695
        %v858 = vpow.pop %v857
        %v859 = vmul.f32 %v856, 1.442695
        %v860 = vpow.pop %v859
        %v861 = vadd.f32 %v858, 1.0
        %v862 = vadd.f32 %v860, 1.0
        %v863 = vrcp.pop %v861
        %v864 = vmul.f32 1.0, %v863
        %v865 = vrcp.pop %v862
        %v866 = vmul.f32 1.0, %v865
        %v867 = vadd.f32 %v833, %v610
        %v868 = vadd.f32 %v836, %v610
        %v869 = vmul.f32 %v850, %v867
        %v870 = vmul.f32 %v852, %v868
        %v871 = vadd.f32 %v622, %v869
        %v872 = vadd.f32 %v625, %v870
        %v873 = vtanh.pop %v871
        %v874 = vtanh.pop %v872
        %v875 = vsub.f32 1.0, %v864
        %v876 = vsub.f32 1.0, %v866
        %v877 = vmul.f32 %v875, %v873
        %v878 = vmul.f32 %v876, %v874
        %v879 = vmul.f32 %v864, %v612
        %v880 = vmul.f32 %v866, %v613
        %v881 = vadd.f32 %v877, %v879
        %v882 = vadd.f32 %v878, %v880
        %s883 = smul.u32 1, 3
        %s884 = smul.addr %s883, 8
        %s885 = scalar_lea.vmem [#allocation2], %s884
        %v886 = vld [vmem:[%s885] sm:$0xff]
        %v887 = vld [vmem:[%s885 + $0x8] sm:$0xff]
        %v888 = vld [vmem:[%s885 + $0x10] sm:$0xff]
        %v889 = vunpack.c.l.bf16 %v886
        %v890 = vunpack.c.l.bf16 %v887
        %v891 = vunpack.c.l.bf16 %v888
        %v892 = vunpack.c.h.bf16 %v886
        %v893 = vunpack.c.h.bf16 %v887
        %v894 = vunpack.c.h.bf16 %v888
        %v895 = vpack.c.bf16 %v882, %v881
        %896 = vmatprep.subr.bf16.mxu0 %v708
        %897 = vmatpush1.bf16.msra.mxu0 %v707
        %898 = vmatprep.subr.bf16.mxu0 %v711
        %899 = vmatpush1.bf16.msra.mxu0 %v710
        %900 = vmatprep.subr.bf16.mxu0 %v714
        %901 = vmatpush1.bf16.msra.mxu0 %v713
        %902 = vmatprep.subr.bf16.mxu0 %v717
        %903 = vmatpush1.bf16.msra.mxu0 %v716
        %904 = vmatprep.subr.bf16.mxu0 %v720
        %905 = vmatpush1.bf16.msra.mxu0 %v719
        %906 = vmatprep.subr.bf16.mxu0 %v723
        %907 = vmatpush1.bf16.msra.mxu0 %v722
        %908 = vmatprep.subr.bf16.mxu0 %v726
        %909 = vmatpush1.bf16.msra.mxu0 %v725
        %910 = vmatprep.subr.bf16.mxu0 %v729
        %911 = vmatpush1.bf16.msra.mxu0 %v728
        %912 = vmatprep.subr.bf16.mxu0 0
        %913 = vmatpush1.bf16.msra.mxu0 0
        %914 = vmatprep.subr.bf16.mxu0 0
        %915 = vmatpush1.bf16.msra.mxu0 0
        %916 = vmatprep.subr.bf16.mxu0 0
        %917 = vmatpush1.bf16.msra.mxu0 0
        %918 = vmatprep.subr.bf16.mxu0 0
        %919 = vmatpush1.bf16.msra.mxu0 0
        %920 = vmatprep.subr.bf16.mxu0 0
        %921 = vmatpush1.bf16.msra.mxu0 0
        %922 = vmatprep.subr.bf16.mxu0 0
        %923 = vmatpush1.bf16.msra.mxu0 0
        %924 = vmatprep.subr.bf16.mxu0 0
        %925 = vmatpush1.bf16.msra.mxu0 0
        %926 = vmatprep.subr.bf16.mxu0 0
        %927 = vmatpush1.bf16.msra.mxu0 0
        %928 = vmatprep.mubr.bf16.mxu0 0
        %929 = vmatmul.mubr.bf16.gmra.mrb[0].mxu0 %v895
        %v930 = vpop.f32.mrb[0].mxu0
        %v931 = vadd.f32 0.0, %v930
        %v932 = vpop.f32.mrb[0].mxu0
        %v933 = vadd.f32 0.0, %v932
        %v934 = vpop.f32.mrb[0].mxu0
        %v935 = vadd.f32 0.0, %v934
        %v936 = vpop.f32.mrb[0].mxu0
        %v937 = vadd.f32 0.0, %v936
        %938 = vdwg.mxu0
        %939 = vmatprep.subr.bf16.mxu0 0
        %940 = vmatpush1.bf16.msra.mxu0 %v709
        %941 = vmatprep.subr.bf16.mxu0 0
        %942 = vmatpush1.bf16.msra.mxu0 %v712
        %943 = vmatprep.subr.bf16.mxu0 0
        %944 = vmatpush1.bf16.msra.mxu0 %v715
        %945 = vmatprep.subr.bf16.mxu0 0
        %946 = vmatpush1.bf16.msra.mxu0 %v718
        %947 = vmatprep.subr.bf16.mxu0 0
        %948 = vmatpush1.bf16.msra.mxu0 %v721
        %949 = vmatprep.subr.bf16.mxu0 0
        %950 = vmatpush1.bf16.msra.mxu0 %v724
        %951 = vmatprep.subr.bf16.mxu0 0
        %952 = vmatpush1.bf16.msra.mxu0 %v727
        %953 = vmatprep.subr.bf16.mxu0 0
        %954 = vmatpush1.bf16.msra.mxu0 %v730
        %955 = vmatprep.subr.bf16.mxu0 0
        %956 = vmatpush1.bf16.msra.mxu0 0
        %957 = vmatprep.subr.bf16.mxu0 0
        %958 = vmatpush1.bf16.msra.mxu0 0
        %959 = vmatprep.subr.bf16.mxu0 0
        %960 = vmatpush1.bf16.msra.mxu0 0
        %961 = vmatprep.subr.bf16.mxu0 0
        %962 = vmatpush1.bf16.msra.mxu0 0
        %963 = vmatprep.subr.bf16.mxu0 0
        %964 = vmatpush1.bf16.msra.mxu0 0
        %965 = vmatprep.subr.bf16.mxu0 0
        %966 = vmatpush1.bf16.msra.mxu0 0
        %967 = vmatprep.subr.bf16.mxu0 0
        %968 = vmatpush1.bf16.msra.mxu0 0
        %969 = vmatprep.subr.bf16.mxu0 0
        %970 = vmatpush1.bf16.msra.mxu0 0
        %971 = vmatprep.mubr.bf16.mxu0 0
        %972 = vmatmul.mubr.bf16.gmra.mrb[0].mxu0 %v895
        %v973 = vpop.f32.mrb[0].mxu0
        %v974 = vadd.f32 0.0, %v973
        %v975 = vpop.f32.mrb[0].mxu0
        %v976 = vpop.f32.mrb[0].mxu0
        %v977 = vadd.f32 0.0, %v976
        %v978 = vpop.f32.mrb[0].mxu0
        %979 = vdwg.mxu0
        %v980 = vadd.f32 %v889, %v931
        %v981 = vadd.f32 %v892, %v935
        %v982 = vxor.u32 %v980, 2147483648
        %v983 = vxor.u32 %v981, 2147483648
        %v984 = vmul.f32 %v982, 1.442695
        %v985 = vpow.pop %v984
        %v986 = vmul.f32 %v983, 1.442695
        %v987 = vpow.pop %v986
        %v988 = vadd.f32 %v985, 1.0
        %v989 = vadd.f32 %v987, 1.0
        %v990 = vrcp.pop %v988
        %v991 = vmul.f32 1.0, %v990
        %v992 = vrcp.pop %v989
        %v993 = vmul.f32 1.0, %v992
        %v994 = vadd.f32 %v890, %v933
        %v995 = vadd.f32 %v893, %v937
        %v996 = vxor.u32 %v994, 2147483648
        %v997 = vxor.u32 %v995, 2147483648
        %v998 = vmul.f32 %v996, 1.442695
        %v999 = vpow.pop %v998
        %v1000 = vmul.f32 %v997, 1.442695
        %v1001 = vpow.pop %v1000
        %v1002 = vadd.f32 %v999, 1.0
        %v1003 = vadd.f32 %v1001, 1.0
        %v1004 = vrcp.pop %v1002
        %v1005 = vmul.f32 1.0, %v1004
        %v1006 = vrcp.pop %v1003
        %v1007 = vmul.f32 1.0, %v1006
        %v1008 = vadd.f32 %v974, %v610
        %v1009 = vadd.f32 %v977, %v610
        %v1010 = vmul.f32 %v991, %v1008
        %v1011 = vmul.f32 %v993, %v1009
        %v1012 = vadd.f32 %v891, %v1010
        %v1013 = vadd.f32 %v894, %v1011
        %v1014 = vtanh.pop %v1012
        %v1015 = vtanh.pop %v1013
        %v1016 = vsub.f32 1.0, %v1005
        %v1017 = vsub.f32 1.0, %v1007
        %v1018 = vmul.f32 %v1016, %v1014
        %v1019 = vmul.f32 %v1017, %v1015
        %v1020 = vmul.f32 %v1005, %v881
        %v1021 = vmul.f32 %v1007, %v882
        %v1022 = vadd.f32 %v1018, %v1020
        %v1023 = vadd.f32 %v1019, %v1021
        %s1024 = smul.u32 2, 3
        %s1025 = smul.addr %s1024, 8
        %s1026 = scalar_lea.vmem [#allocation2], %s1025
        %v1027 = vld [vmem:[%s1026] sm:$0xff]
        %v1028 = vld [vmem:[%s1026 + $0x8] sm:$0xff]
        %v1029 = vld [vmem:[%s1026 + $0x10] sm:$0xff]
        %v1030 = vunpack.c.l.bf16 %v1027
        %v1031 = vunpack.c.l.bf16 %v1028
        %v1032 = vunpack.c.l.bf16 %v1029
        %v1033 = vunpack.c.h.bf16 %v1027
        %v1034 = vunpack.c.h.bf16 %v1028
        %v1035 = vunpack.c.h.bf16 %v1029
        %v1036 = vpack.c.bf16 %v1023, %v1022
        %1037 = vmatprep.subr.bf16.mxu0 %v708
        %1038 = vmatpush1.bf16.msra.mxu0 %v707
        %1039 = vmatprep.subr.bf16.mxu0 %v711
        %1040 = vmatpush1.bf16.msra.mxu0 %v710
        %1041 = vmatprep.subr.bf16.mxu0 %v714
        %1042 = vmatpush1.bf16.msra.mxu0 %v713
        %1043 = vmatprep.subr.bf16.mxu0 %v717
        %1044 = vmatpush1.bf16.msra.mxu0 %v716
        %1045 = vmatprep.subr.bf16.mxu0 %v720
        %1046 = vmatpush1.bf16.msra.mxu0 %v719
        %1047 = vmatprep.subr.bf16.mxu0 %v723
        %1048 = vmatpush1.bf16.msra.mxu0 %v722
        %1049 = vmatprep.subr.bf16.mxu0 %v726
        %1050 = vmatpush1.bf16.msra.mxu0 %v725
        %1051 = vmatprep.subr.bf16.mxu0 %v729
        %1052 = vmatpush1.bf16.msra.mxu0 %v728
        %1053 = vmatprep.subr.bf16.mxu0 0
        %1054 = vmatpush1.bf16.msra.mxu0 0
        %1055 = vmatprep.subr.bf16.mxu0 0
        %1056 = vmatpush1.bf16.msra.mxu0 0
        %1057 = vmatprep.subr.bf16.mxu0 0
        %1058 = vmatpush1.bf16.msra.mxu0 0
        %1059 = vmatprep.subr.bf16.mxu0 0
        %1060 = vmatpush1.bf16.msra.mxu0 0
        %1061 = vmatprep.subr.bf16.mxu0 0
        %1062 = vmatpush1.bf16.msra.mxu0 0
        %1063 = vmatprep.subr.bf16.mxu0 0
        %1064 = vmatpush1.bf16.msra.mxu0 0
        %1065 = vmatprep.subr.bf16.mxu0 0
        %1066 = vmatpush1.bf16.msra.mxu0 0
        %1067 = vmatprep.subr.bf16.mxu0 0
        %1068 = vmatpush1.bf16.msra.mxu0 0
        %1069 = vmatprep.mubr.bf16.mxu0 0
        %1070 = vmatmul.mubr.bf16.gmra.mrb[0].mxu0 %v1036
        %v1071 = vpop.f32.mrb[0].mxu0
        %v1072 = vadd.f32 0.0, %v1071
        %v1073 = vpop.f32.mrb[0].mxu0
        %v1074 = vadd.f32 0.0, %v1073
        %v1075 = vpop.f32.mrb[0].mxu0
        %v1076 = vadd.f32 0.0, %v1075
        %v1077 = vpop.f32.mrb[0].mxu0
        %v1078 = vadd.f32 0.0, %v1077
        %1079 = vdwg.mxu0
        %1080 = vmatprep.subr.bf16.mxu0 0
        %1081 = vmatpush1.bf16.msra.mxu0 %v709
        %1082 = vmatprep.subr.bf16.mxu0 0
        %1083 = vmatpush1.bf16.msra.mxu0 %v712
        %1084 = vmatprep.subr.bf16.mxu0 0
        %1085 = vmatpush1.bf16.msra.mxu0 %v715
        %1086 = vmatprep.subr.bf16.mxu0 0
        %1087 = vmatpush1.bf16.msra.mxu0 %v718
        %1088 = vmatprep.subr.bf16.mxu0 0
        %1089 = vmatpush1.bf16.msra.mxu0 %v721
        %1090 = vmatprep.subr.bf16.mxu0 0
        %1091 = vmatpush1.bf16.msra.mxu0 %v724
        %1092 = vmatprep.subr.bf16.mxu0 0
        %1093 = vmatpush1.bf16.msra.mxu0 %v727
        %1094 = vmatprep.subr.bf16.mxu0 0
        %1095 = vmatpush1.bf16.msra.mxu0 %v730
        %1096 = vmatprep.subr.bf16.mxu0 0
        %1097 = vmatpush1.bf16.msra.mxu0 0
        %1098 = vmatprep.subr.bf16.mxu0 0
        %1099 = vmatpush1.bf16.msra.mxu0 0
        %1100 = vmatprep.subr.bf16.mxu0 0
        %1101 = vmatpush1.bf16.msra.mxu0 0
        %1102 = vmatprep.subr.bf16.mxu0 0
        %1103 = vmatpush1.bf16.msra.mxu0 0
        %1104 = vmatprep.subr.bf16.mxu0 0
        %1105 = vmatpush1.bf16.msra.mxu0 0
        %1106 = vmatprep.subr.bf16.mxu0 0
        %1107 = vmatpush1.bf16.msra.mxu0 0
        %1108 = vmatprep.subr.bf16.mxu0 0
        %1109 = vmatpush1.bf16.msra.mxu0 0
        %1110 = vmatprep.subr.bf16.mxu0 0
        %1111 = vmatpush1.bf16.msra.mxu0 0
        %1112 = vmatprep.mubr.bf16.mxu0 0
        %1113 = vmatmul.mubr.bf16.gmra.mrb[0].mxu0 %v1036
        %v1114 = vpop.f32.mrb[0].mxu0
        %v1115 = vadd.f32 0.0, %v1114
        %v1116 = vpop.f32.mrb[0].mxu0
        %v1117 = vpop.f32.mrb[0].mxu0
        %v1118 = vadd.f32 0.0, %v1117
        %v1119 = vpop.f32.mrb[0].mxu0
        %1120 = vdwg.mxu0
        %v1121 = vadd.f32 %v1030, %v1072
        %v1122 = vadd.f32 %v1033, %v1076
        %v1123 = vxor.u32 %v1121, 2147483648
        %v1124 = vxor.u32 %v1122, 2147483648
        %v1125 = vmul.f32 %v1123, 1.442695
        %v1126 = vpow.pop %v1125
        %v1127 = vmul.f32 %v1124, 1.442695
        %v1128 = vpow.pop %v1127
        %v1129 = vadd.f32 %v1126, 1.0
        %v1130 = vadd.f32 %v1128, 1.0
        %v1131 = vrcp.pop %v1129
        %v1132 = vmul.f32 1.0, %v1131
        %v1133 = vrcp.pop %v1130
        %v1134 = vmul.f32 1.0, %v1133
        %v1135 = vadd.f32 %v1031, %v1074
        %v1136 = vadd.f32 %v1034, %v1078
        %v1137 = vxor.u32 %v1135, 2147483648
        %v1138 = vxor.u32 %v1136, 2147483648
        %v1139 = vmul.f32 %v1137, 1.442695
        %v1140 = vpow.pop %v1139
        %v1141 = vmul.f32 %v1138, 1.442695
        %v1142 = vpow.pop %v1141
        %v1143 = vadd.f32 %v1140, 1.0
        %v1144 = vadd.f32 %v1142, 1.0
        %v1145 = vrcp.pop %v1143
        %v1146 = vmul.f32 1.0, %v1145
        %v1147 = vrcp.pop %v1144
        %v1148 = vmul.f32 1.0, %v1147
        %v1149 = vadd.f32 %v1115, %v610
        %v1150 = vadd.f32 %v1118, %v610
        %v1151 = vmul.f32 %v1132, %v1149
        %v1152 = vmul.f32 %v1134, %v1150
        %v1153 = vadd.f32 %v1032, %v1151
        %v1154 = vadd.f32 %v1035, %v1152
        %v1155 = vtanh.pop %v1153
        %v1156 = vtanh.pop %v1154
        %v1157 = vsub.f32 1.0, %v1146
        %v1158 = vsub.f32 1.0, %v1148
        %v1159 = vmul.f32 %v1157, %v1155
        %v1160 = vmul.f32 %v1158, %v1156
        %v1161 = vmul.f32 %v1146, %v1022
        %v1162 = vmul.f32 %v1148, %v1023
        %v1163 = vadd.f32 %v1159, %v1161
        %v1164 = vadd.f32 %v1160, %v1162
        %s1165 = smul.u32 3, 3
        %s1166 = smul.addr %s1165, 8
        %s1167 = scalar_lea.vmem [#allocation2], %s1166
        %v1168 = vld [vmem:[%s1167] sm:$0xff]
        %v1169 = vld [vmem:[%s1167 + $0x8] sm:$0xff]
        %v1170 = vld [vmem:[%s1167 + $0x10] sm:$0xff]
        %v1171 = vunpack.c.l.bf16 %v1168
        %v1172 = vunpack.c.l.bf16 %v1169
        %v1173 = vunpack.c.l.bf16 %v1170
        %v1174 = vunpack.c.h.bf16 %v1168
        %v1175 = vunpack.c.h.bf16 %v1169
        %v1176 = vunpack.c.h.bf16 %v1170
        %v1177 = vpack.c.bf16 %v1164, %v1163
        %1178 = vmatprep.subr.bf16.mxu0 %v708
        %1179 = vmatpush1.bf16.msra.mxu0 %v707
        %1180 = vmatprep.subr.bf16.mxu0 %v711
        %1181 = vmatpush1.bf16.msra.mxu0 %v710
        %1182 = vmatprep.subr.bf16.mxu0 %v714
        %1183 = vmatpush1.bf16.msra.mxu0 %v713
        %1184 = vmatprep.subr.bf16.mxu0 %v717
        %1185 = vmatpush1.bf16.msra.mxu0 %v716
        %1186 = vmatprep.subr.bf16.mxu0 %v720
        %1187 = vmatpush1.bf16.msra.mxu0 %v719
        %1188 = vmatprep.subr.bf16.mxu0 %v723
        %1189 = vmatpush1.bf16.msra.mxu0 %v722
        %1190 = vmatprep.subr.bf16.mxu0 %v726
        %1191 = vmatpush1.bf16.msra.mxu0 %v725
        %1192 = vmatprep.subr.bf16.mxu0 %v729
        %1193 = vmatpush1.bf16.msra.mxu0 %v728
        %1194 = vmatprep.subr.bf16.mxu0 0
        %1195 = vmatpush1.bf16.msra.mxu0 0
        %1196 = vmatprep.subr.bf16.mxu0 0
        %1197 = vmatpush1.bf16.msra.mxu0 0
        %1198 = vmatprep.subr.bf16.mxu0 0
        %1199 = vmatpush1.bf16.msra.mxu0 0
        %1200 = vmatprep.subr.bf16.mxu0 0
        %1201 = vmatpush1.bf16.msra.mxu0 0
        %1202 = vmatprep.subr.bf16.mxu0 0
        %1203 = vmatpush1.bf16.msra.mxu0 0
        %1204 = vmatprep.subr.bf16.mxu0 0
        %1205 = vmatpush1.bf16.msra.mxu0 0
        %1206 = vmatprep.subr.bf16.mxu0 0
        %1207 = vmatpush1.bf16.msra.mxu0 0
        %1208 = vmatprep.subr.bf16.mxu0 0
        %1209 = vmatpush1.bf16.msra.mxu0 0
        %1210 = vmatprep.mubr.bf16.mxu0 0
        %1211 = vmatmul.mubr.bf16.gmra.mrb[0].mxu0 %v1177
        %v1212 = vpop.f32.mrb[0].mxu0
        %v1213 = vadd.f32 0.0, %v1212
        %v1214 = vpop.f32.mrb[0].mxu0
        %v1215 = vadd.f32 0.0, %v1214
        %v1216 = vpop.f32.mrb[0].mxu0
        %v1217 = vadd.f32 0.0, %v1216
        %v1218 = vpop.f32.mrb[0].mxu0
        %v1219 = vadd.f32 0.0, %v1218
        %1220 = vdwg.mxu0
        %1221 = vmatprep.subr.bf16.mxu0 0
        %1222 = vmatpush1.bf16.msra.mxu0 %v709
        %1223 = vmatprep.subr.bf16.mxu0 0
        %1224 = vmatpush1.bf16.msra.mxu0 %v712
        %1225 = vmatprep.subr.bf16.mxu0 0
        %1226 = vmatpush1.bf16.msra.mxu0 %v715
        %1227 = vmatprep.subr.bf16.mxu0 0
        %1228 = vmatpush1.bf16.msra.mxu0 %v718
        %1229 = vmatprep.subr.bf16.mxu0 0
        %1230 = vmatpush1.bf16.msra.mxu0 %v721
        %1231 = vmatprep.subr.bf16.mxu0 0
        %1232 = vmatpush1.bf16.msra.mxu0 %v724
        %1233 = vmatprep.subr.bf16.mxu0 0
        %1234 = vmatpush1.bf16.msra.mxu0 %v727
        %1235 = vmatprep.subr.bf16.mxu0 0
        %1236 = vmatpush1.bf16.msra.mxu0 %v730
        %1237 = vmatprep.subr.bf16.mxu0 0
        %1238 = vmatpush1.bf16.msra.mxu0 0
        %1239 = vmatprep.subr.bf16.mxu0 0
        %1240 = vmatpush1.bf16.msra.mxu0 0
        %1241 = vmatprep.subr.bf16.mxu0 0
        %1242 = vmatpush1.bf16.msra.mxu0 0
        %1243 = vmatprep.subr.bf16.mxu0 0
        %1244 = vmatpush1.bf16.msra.mxu0 0
        %1245 = vmatprep.subr.bf16.mxu0 0
        %1246 = vmatpush1.bf16.msra.mxu0 0
        %1247 = vmatprep.subr.bf16.mxu0 0
        %1248 = vmatpush1.bf16.msra.mxu0 0
        %1249 = vmatprep.subr.bf16.mxu0 0
        %1250 = vmatpush1.bf16.msra.mxu0 0
        %1251 = vmatprep.subr.bf16.mxu0 0
        %1252 = vmatpush1.bf16.msra.mxu0 0
        %1253 = vmatprep.mubr.bf16.mxu0 0
        %1254 = vmatmul.mubr.bf16.gmra.mrb[0].mxu0 %v1177
        %v1255 = vpop.f32.mrb[0].mxu0
        %v1256 = vadd.f32 0.0, %v1255
        %v1257 = vpop.f32.mrb[0].mxu0
        %v1258 = vpop.f32.mrb[0].mxu0
        %v1259 = vadd.f32 0.0, %v1258
        %v1260 = vpop.f32.mrb[0].mxu0
        %1261 = vdwg.mxu0
        %v1262 = vadd.f32 %v1171, %v1213
        %v1263 = vadd.f32 %v1174, %v1217
        %v1264 = vxor.u32 %v1262, 2147483648
        %v1265 = vxor.u32 %v1263, 2147483648
        %v1266 = vmul.f32 %v1264, 1.442695
        %v1267 = vpow.pop %v1266
        %v1268 = vmul.f32 %v1265, 1.442695
        %v1269 = vpow.pop %v1268
        %v1270 = vadd.f32 %v1267, 1.0
        %v1271 = vadd.f32 %v1269, 1.0
        %v1272 = vrcp.pop %v1270
        %v1273 = vmul.f32 1.0, %v1272
        %v1274 = vrcp.pop %v1271
        %v1275 = vmul.f32 1.0, %v1274
        %v1276 = vadd.f32 %v1172, %v1215
        %v1277 = vadd.f32 %v1175, %v1219
        %v1278 = vxor.u32 %v1276, 2147483648
        %v1279 = vxor.u32 %v1277, 2147483648
        %v1280 = vmul.f32 %v1278, 1.442695
        %v1281 = vpow.pop %v1280
        %v1282 = vmul.f32 %v1279, 1.442695
        %v1283 = vpow.pop %v1282
        %v1284 = vadd.f32 %v1281, 1.0
        %v1285 = vadd.f32 %v1283, 1.0
        %v1286 = vrcp.pop %v1284
        %v1287 = vmul.f32 1.0, %v1286
        %v1288 = vrcp.pop %v1285
        %v1289 = vmul.f32 1.0, %v1288
        %v1290 = vadd.f32 %v1256, %v610
        %v1291 = vadd.f32 %v1259, %v610
        %v1292 = vmul.f32 %v1273, %v1290
        %v1293 = vmul.f32 %v1275, %v1291
        %v1294 = vadd.f32 %v1173, %v1292
        %v1295 = vadd.f32 %v1176, %v1293
        %v1296 = vtanh.pop %v1294
        %v1297 = vtanh.pop %v1295
        %v1298 = vsub.f32 1.0, %v1287
        %v1299 = vsub.f32 1.0, %v1289
        %v1300 = vmul.f32 %v1298, %v1296
        %v1301 = vmul.f32 %v1299, %v1297
        %v1302 = vmul.f32 %v1287, %v1163
        %v1303 = vmul.f32 %v1289, %v1164
        %v1304 = vadd.f32 %v1300, %v1302
        %v1305 = vadd.f32 %v1301, %v1303
        %1306 = vst [vmem:[#allocation3] sm:$0xff] %v1304
        %1307 = vst [vmem:[#allocation3 + $0x8] sm:$0xff] %v1305
        %p1308 = scmp.eq.s32.totalorder %s24, 1
        // Predicated region
        $region57: #{rnn_encoder_forward.1} parent=47 // pred_check
          %p1309 = pneg %p1308
        $region58: #{rnn_encoder_forward.1} parent=47 // pred_check_branch
          %1311 = sbr.rel (%p1309) target = $region60
        $region59: #{rnn_encoder_forward.1} parent=47 // pred_region
          %v1312 = vpack.c.bf16 %v1305, %v1304
          %v1313 = vld [vmem:[#allocation4] sm:$0xf]
          %v1314 = vld [vmem:[#allocation4 + $0x4] sm:$0xf]
          %v1315 = vld [vmem:[#allocation4 + $0x8] sm:$0xf]
          %v1316 = vld [vmem:[#allocation4 + $0xc] sm:$0xf]
          %v1317 = vld [vmem:[#allocation4 + $0x10] sm:$0xf]
          %v1318 = vld [vmem:[#allocation4 + $0x14] sm:$0xf]
          %v1319 = vld [vmem:[#allocation4 + $0x18] sm:$0xf]
          %v1320 = vld [vmem:[#allocation4 + $0x1c] sm:$0xf]
          %v1321 = vld [vmem:[#allocation4 + $0x20] sm:$0xf]
          %v1322 = vld [vmem:[#allocation4 + $0x24] sm:$0xf]
          %v1323 = vld [vmem:[#allocation4 + $0x28] sm:$0xf]
          %v1324 = vld [vmem:[#allocation4 + $0x2c] sm:$0xf]
          %v1325 = vld [vmem:[#allocation4 + $0x30] sm:$0xf]
          %v1326 = vld [vmem:[#allocation4 + $0x34] sm:$0xf]
          %v1327 = vld [vmem:[#allocation4 + $0x38] sm:$0xf]
          %v1328 = vld [vmem:[#allocation4 + $0x3c] sm:$0xf]
          %v1329 = vld [vmem:[%s6] sm:$0x1]
          %v1331 = vlaneseq
          %v1332 = vshrl.u32 %v1331, 7
          %v1333 = vsub.s32 0, %v1332
          %v1334 = vrot.slane %v1329, %v1333
          %v1352 = vunpack.c.l.b16 %v1313
          %v1353 = vunpack.c.l.b16 %v1314
          %v1354 = vunpack.c.l.b16 %v1315
          %v1355 = vunpack.c.l.b16 %v1316
          %v1356 = vunpack.c.l.b16 %v1317
          %v1357 = vunpack.c.l.b16 %v1318
          %v1358 = vunpack.c.l.b16 %v1319
          %v1359 = vunpack.c.l.b16 %v1320
          %v1360 = vunpack.c.l.b16 %v1321
          %v1361 = vunpack.c.l.b16 %v1322
          %v1362 = vunpack.c.l.b16 %v1323
          %v1363 = vunpack.c.l.b16 %v1324
          %v1364 = vunpack.c.l.b16 %v1325
          %v1365 = vunpack.c.l.b16 %v1326
          %v1366 = vunpack.c.l.b16 %v1327
          %v1367 = vunpack.c.l.b16 %v1328
          %v1368 = vpack.c.b16 %v1353, %v1352
          %v1369 = vpack.c.b16 %v1355, %v1354
          %v1370 = vpack.c.b16 %v1357, %v1356
          %v1371 = vpack.c.b16 %v1359, %v1358
          %v1372 = vpack.c.b16 %v1361, %v1360
          %v1373 = vpack.c.b16 %v1363, %v1362
          %v1374 = vpack.c.b16 %v1365, %v1364
          %v1375 = vpack.c.b16 %v1367, %v1366
          %1384 = vmatprep.subr.bf16.mxu0 0
          %1385 = vmatpush1.bf16.msra.mxu0 %v1368
          %1386 = vmatprep.subr.bf16.mxu0 0
          %1387 = vmatpush1.bf16.msra.mxu0 %v1369
          %1388 = vmatprep.subr.bf16.mxu0 0
          %1389 = vmatpush1.bf16.msra.mxu0 %v1370
          %1390 = vmatprep.subr.bf16.mxu0 0
          %1391 = vmatpush1.bf16.msra.mxu0 %v1371
          %1392 = vmatprep.subr.bf16.mxu0 0
          %1393 = vmatpush1.bf16.msra.mxu0 %v1372
          %1394 = vmatprep.subr.bf16.mxu0 0
          %1395 = vmatpush1.bf16.msra.mxu0 %v1373
          %1396 = vmatprep.subr.bf16.mxu0 0
          %1397 = vmatpush1.bf16.msra.mxu0 %v1374
          %1398 = vmatprep.subr.bf16.mxu0 0
          %1399 = vmatpush1.bf16.msra.mxu0 %v1375
          %1400 = vmatprep.subr.bf16.mxu0 0
          %1401 = vmatpush1.bf16.msra.mxu0 0
          %1402 = vmatprep.subr.bf16.mxu0 0
          %1403 = vmatpush1.bf16.msra.mxu0 0
          %1404 = vmatprep.subr.bf16.mxu0 0
          %1405 = vmatpush1.bf16.msra.mxu0 0
          %1406 = vmatprep.subr.bf16.mxu0 0
          %1407 = vmatpush1.bf16.msra.mxu0 0
          %1408 = vmatprep.subr.bf16.mxu0 0
          %1409 = vmatpush1.bf16.msra.mxu0 0
          %1410 = vmatprep.subr.bf16.mxu0 0
          %1411 = vmatpush1.bf16.msra.mxu0 0
          %1412 = vmatprep.subr.bf16.mxu0 0
          %1413 = vmatpush1.bf16.msra.mxu0 0
          %1414 = vmatprep.subr.bf16.mxu0 0
          %1415 = vmatpush1.bf16.msra.mxu0 0
          %1416 = vmatprep.mubr.bf16.mxu0 0
          %1417 = vmatmul.mubr.bf16.gmra.mrb[0].mxu0 %v1312
          %v1418 = vpop.f32.mrb[0].mxu0
          %v1419 = vadd.f32 %v1334, %v1418
          %v1420 = vpop.f32.mrb[0].mxu0
          %v1421 = vpop.f32.mrb[0].mxu0
          %v1422 = vadd.f32 %v1334, %v1421
          %v1423 = vpop.f32.mrb[0].mxu0
          %1424 = vdwg.mxu0
          %1425 = vst [vmem:[%s321] sm:$0xff] %v1419
          %1426 = vst [vmem:[%s321 + $0x8] sm:$0xff] %v1422
        $region60: #{rnn_encoder_forward.1} parent=47 // pred_fallthru
          _
        %s1427 = smul.u32 2, %s23
        %p1428 = scmp.lt.s32.totalorder %s1427, 1
        %s1429 = scalar_select %p1428, %s1427, 1
        %s1430 = smul.addr %s1429, 8
        %s1431 = scalar_lea.vmem %s7, %s1430
        // Predicated region
        $region61: #{rnn_encoder_forward.1} parent=47 // pred_check
          %p1432 = pneg %p203
        $region62: #{rnn_encoder_forward.1} parent=47 // pred_check_branch
          %1434 = sbr.rel (%p1432) target = $region64
        $region63: #{rnn_encoder_forward.1} parent=47 // pred_region
          %s1435 = smul.u32 2, %s23
        $region64: #{rnn_encoder_forward.1} parent=47 // pred_fallthru
          _
        // Predicated region
        $region65: #{rnn_encoder_forward.1} parent=47 // pred_check
          %p1436 = pneg %p203
        $region66: #{rnn_encoder_forward.1} parent=47 // pred_check_branch
          %1438 = sbr.rel (%p1436) target = $region68
        $region67: #{rnn_encoder_forward.1} parent=47 // pred_region
          %s1439 = smul.u32 2, %s23
          %p1440 = scmp.lt.s32.totalorder %s1439, 1
          %s1441 = scalar_select %p1440, %s1439, 1
          %s1442 = smul.addr %s1441, 8
          %s1443 = scalar_lea.vmem %s7, %s1442
        $region68: #{rnn_encoder_forward.1} parent=47 // pred_fallthru
          _
      $region48: #{rnn_encoder_forward.1} parent=5 // pred_fallthru
        _
      %p1444 = scmp.le.s32.totalorder 2, %s14
      // Predicated region
      $region69: #{rnn_encoder_forward.1} parent=5 // pred_check
        %p1445 = pneg %p1444
      $region70: #{rnn_encoder_forward.1} parent=5 // pred_check_branch
        %1447 = sbr.rel (%p1445) target = $region72
      $region71: #{rnn_encoder_forward.1} parent=5 // pred_region
        %s1448 = ssub.s32 %s14, 2
      $region72: #{rnn_encoder_forward.1} parent=5 // pred_fallthru
        _
    $region6: #{rnn_encoder_forward.1} parent=1 // loop_footer
      %s18 = sadd.s32 1, %s14
    $region7: #{rnn_encoder_forward.1} parent=1 // loop_footer_branch
      %13 = sbr.rel target = $region3
    $region8: #{rnn_encoder_forward.1} parent=1 // loop_exit
      _
    %1449 = vsyncpa [#allocation5], 1
    %s1450 = scalar_lea.sflag [#allocation5], 1
    %1451 = vsyncpa %s1450, 1

</llo_original>
